<compile_context>
chip_gen: v6e
topology: v6e:2x2x1
jax: 0.10.0
libtpu: 0.0.40
codegen_flags: <defaults>
</compile_context>

<pallas_src>
import functools

import jax
import jax.numpy as jnp
from jax import lax
from jax.experimental import pallas as pl
from jax.experimental.pallas import tpu as pltpu


def _point_pool_kernel(x_ref, v_ref, o_ref, acc_ref, *, D, H, W, TD):
    HW = H * W
    k = pl.program_id(2)

    @pl.when(k == 0)
    def _():
        acc_ref[...] = jnp.zeros_like(acc_ref)

    # Point coordinates, each (1, TP), in (d, h, w) voxel-index order.
    d = v_ref[0, 0:1, :]
    h = v_ref[0, 1:2, :]
    w = v_ref[0, 2:3, :]

    # padding_mode='border' + align_corners=True  =>  clamp coordinate to [0, size-1].
    d = jnp.clip(d, 0.0, float(D - 1))
    h = jnp.clip(h, 0.0, float(H - 1))
    w = jnp.clip(w, 0.0, float(W - 1))

    d0 = jnp.floor(d)
    h0 = jnp.floor(h)
    w0 = jnp.floor(w)
    fd = d - d0
    fh = h - h0
    fw = w - w0

    d0i = d0.astype(jnp.int32)
    h0i = h0.astype(jnp.int32)
    w0i = w0.astype(jnp.int32)
    d1i = jnp.minimum(d0i + 1, D - 1)
    h1i = jnp.minimum(h0i + 1, H - 1)
    w1i = jnp.minimum(w0i + 1, W - 1)

    tp = d.shape[1]

    def axis_onehot(n, i0, i1, frac, offset=0):
        # (n, tp) weighted one-hot: weight (1-frac) at row i0, frac at row i1.
        # At clamped borders i0 == i1 with frac == 0, so the duplicate sums to 1.
        rows = lax.broadcasted_iota(jnp.int32, (n, tp), 0) + offset
        return (jnp.where(rows == i0, 1.0 - frac, 0.0)
                + jnp.where(rows == i1, frac, 0.0))

    a_d = axis_onehot(TD, d0i, d1i, fd, offset=k * TD)   # (TD, tp)  rows of this chunk
    a_h = axis_onehot(H, h0i, h1i, fh)                   # (H,  tp)
    a_w = axis_onehot(W, w0i, w1i, fw)                   # (W,  tp)

    # Separable (Khatri-Rao) build of this depth-chunk's trilinear selection matrix.
    a_dh = (a_d[:, None, :] * a_h[None, :, :]).reshape(TD * H, tp)      # (TD*H, tp)
    sel = (a_dh[:, None, :] * a_w[None, :, :]).reshape(TD * HW, tp)     # (TD*HW, tp)

    x_blk = x_ref[0]                                     # (C, TD*HW), native dtype
    acc_ref[...] += jnp.dot(x_blk, sel.astype(x_blk.dtype),
                            preferred_element_type=jnp.float32)

    @pl.when(k == pl.num_programs(2) - 1)
    def _():
        o_ref[0] = acc_ref[...].astype(o_ref.dtype)


def _choose_td(D, HW, max_rows=1024):
    """Depth-chunk size: TD | D and (TD == D or (TD*HW) % 128 == 0)."""
    valid = [td for td in range(1, D + 1)
             if D % td == 0 and (td == D or (td * HW) % 128 == 0)]
    fitting = [td for td in valid if td * HW <= max_rows]
    return max(fitting) if fitting else min(valid)


def _choose_tp(p_pad):
    """Point-tile size: multiple of 128, small enough to keep several grid tiles."""
    if p_pad % 512 == 0 and p_pad >= 1024:
        return 512
    if p_pad % 256 == 0 and p_pad >= 512:
        return 256
    return 128


def point_pooling(x, v):
    """x: (B, C, D, H, W); v: (B, P, 3) voxel coords in (d, h, w) order. -> (B, C, P)."""
    B, C, D, H, W = x.shape
    P = v.shape[1]
    HW = H * W
    DHW = D * HW

    # Pad the point axis to a multiple of 128 so output stores stay lane-dense.
    P_pad = ((P + 127) // 128) * 128
    v_t = jnp.transpose(v, (0, 2, 1)).astype(jnp.float32)          # (B, 3, P)
    if P_pad != P:
        v_t = jnp.pad(v_t, ((0, 0), (0, 0), (0, P_pad - P)))

    TP = _choose_tp(P_pad)
    TD = _choose_td(D, HW)

    x_flat = x.reshape(B, C, DHW)
    kernel = functools.partial(_point_pool_kernel, D=D, H=H, W=W, TD=TD)
    grid = (B, P_pad // TP, D // TD)

    # Rough VMEM budget (double-buffered blocks + accumulator + sel chunk & temps).
    itemsize = x.dtype.itemsize
    est_vmem = (2 * C * TD * HW * itemsize        # x block (double-buffered)
                + 2 * 3 * TP * 4                  # v block
                + 2 * C * TP * itemsize           # out block
                + C * TP * 4                      # f32 accumulator
                + 2 * TD * HW * TP * 4)           # sel chunk + temporaries
    vmem_limit = None
    if est_vmem > 24 * 1024 * 1024:
        vmem_limit = int(min(2 * est_vmem, 96 * 1024 * 1024))

    cost = pl.CostEstimate(
        flops=2 * B * C * DHW * P_pad,
        transcendentals=0,
        bytes_accessed=(B * C * DHW * itemsize * (P_pad // TP)   # x re-fetched per P tile
                        + B * 3 * P_pad * 4
                        + B * C * P_pad * itemsize),
    )

    out = pl.pallas_call(
        kernel,
        out_shape=jax.ShapeDtypeStruct((B, C, P_pad), x.dtype),
        grid_spec=pltpu.PrefetchScalarGridSpec(
            num_scalar_prefetch=0,
            grid=grid,
            in_specs=[
                pl.BlockSpec((1, C, TD * HW), lambda b, j, k: (b, 0, k)),
                pl.BlockSpec((1, 3, TP), lambda b, j, k: (b, 0, j)),
            ],
            out_specs=pl.BlockSpec((1, C, TP), lambda b, j, k: (b, 0, j)),
            scratch_shapes=[pltpu.VMEM((C, TP), jnp.float32)],
        ),
        compiler_params=pltpu.CompilerParams(
            dimension_semantics=("parallel", "parallel", "arbitrary"),
            vmem_limit_bytes=vmem_limit),
        cost_estimate=cost,
    )(x_flat, v_t)

    if P_pad != P:
        out = out[:, :, :P]
    return out


def point_pooling_ref(x, v):
    """Pure-JAX reference (trilinear, border-clamped), for correctness check."""
    B, C, D, H, W = x.shape
    d = jnp.clip(v[..., 0], 0.0, D - 1)
    h = jnp.clip(v[..., 1], 0.0, H - 1)
    w = jnp.clip(v[..., 2], 0.0, W - 1)
    d0 = jnp.floor(d); h0 = jnp.floor(h); w0 = jnp.floor(w)
    fd = d - d0; fh = h - h0; fw = w - w0
    d0 = d0.astype(jnp.int32); h0 = h0.astype(jnp.int32); w0 = w0.astype(jnp.int32)
    d1 = jnp.minimum(d0 + 1, D - 1)
    h1 = jnp.minimum(h0 + 1, H - 1)
    w1 = jnp.minimum(w0 + 1, W - 1)
    x_flat = x.reshape(B, C, D * H * W)

    def gather(di, hi, wi):
        idx = di * (H * W) + hi * W + wi                              # (B, P)
        return jnp.take_along_axis(x_flat, idx[:, None, :], axis=2)   # (B, C, P)

    out = jnp.zeros((B, C, v.shape[1]), jnp.float32)
    for di, wd in ((d0, 1.0 - fd), (d1, fd)):
        for hi, wh in ((h0, 1.0 - fh), (h1, fh)):
            for wi, ww in ((w0, 1.0 - fw), (w1, fw)):
                out = out + gather(di, hi, wi) * (wd * wh * ww)[:, None, :]
    return out.astype(x.dtype)


if __name__ == "__main__":
    key = jax.random.PRNGKey(0)
    k_x, k_v = jax.random.split(key)

    # Non-cubic volume + multiple depth chunks (TD=8 -> 2 K-steps) + 2 point tiles.
    B, C, D, H, W = 2, 4, 16, 8, 16
    P = 256

    x = jax.random.normal(k_x, (B, C, D, H, W), dtype=jnp.float32)
    # Points in (d, h, w) voxel coords, slightly out of range to exercise border clamp.
    sizes = jnp.array([D, H, W], dtype=jnp.float32)
    u = jax.random.uniform(k_v, (B, P, 3), dtype=jnp.float32)
    v = u * sizes - 0.5

    out = point_pooling(x, v)
    jax.block_until_ready(out)

    ref = point_pooling_ref(x, v)
    assert out.shape == (B, C, P)
    assert jnp.allclose(out, ref, atol=1e-4, rtol=1e-4), \
        f"max err {jnp.max(jnp.abs(out - ref))}"
    print("KERNEL_OK")
</pallas_src>

<mosaic_0001>
module attributes {stable_mosaic.version = 11 : i64} {
  func.func @_point_pool_kernel(%arg0: i32, %arg1: i32, %arg2: i32, %arg3: memref<1x4x1024xf32, #tpu.memory_space<vmem>>, %arg4: memref<1x3x128xf32, #tpu.memory_space<vmem>>, %arg5: memref<1x4x128xf32, #tpu.memory_space<vmem>>, %arg6: memref<4x128xf32, #tpu.memory_space<vmem>>) attributes {dimension_semantics = [#tpu.dimension_semantics<parallel>, #tpu.dimension_semantics<parallel>, #tpu.dimension_semantics<arbitrary>], iteration_bounds = array<i64: 2, 2, 2>, scalar_prefetch = 0 : i64, scratch_operands = 1 : i64, tpu.core_type = #tpu.core_type<tc>, window_params = [{transform_indices = @transform_0, window_bounds = array<i64: 1, 4, 1024>}, {transform_indices = @transform_1, window_bounds = array<i64: 1, 3, 128>}, {transform_indices = @transform_2, window_bounds = array<i64: 1, 4, 128>}]} {
    %c0_i32 = arith.constant 0 : i32
    %0 = arith.cmpi eq, %arg2, %c0_i32 : i32
    %1 = arith.extui %0 : i1 to i32
    %c0_i32_0 = arith.constant 0 : i32
    %2 = arith.cmpi ne, %1, %c0_i32_0 : i32
    scf.if %2 {
      %cst_36 = arith.constant 0.000000e+00 : f32
      %118 = vector.broadcast %cst_36 : f32 to vector<4x128xf32>
      %c0_37 = arith.constant 0 : index
      %c0_38 = arith.constant 0 : index
      %119 = vector.load %arg6[%c0_37, %c0_38] : memref<4x128xf32, #tpu.memory_space<vmem>>, vector<4x128xf32>
      tpu.vector_store %arg6[%c0_37, %c0_38], %118 {strides = array<i32>} : memref<4x128xf32, #tpu.memory_space<vmem>>, vector<4x128xf32>,
    } else {
    }
    %c0 = arith.constant 0 : index
    %c0_1 = arith.constant 0 : index
    %c0_2 = arith.constant 0 : index
    %3 = vector.load %arg4[%c0, %c0_1, %c0_2] : memref<1x3x128xf32, #tpu.memory_space<vmem>>, vector<1x1x128xf32>
    %4 = vector.shape_cast %3 : vector<1x1x128xf32> to vector<1x128xf32>
    %c0_3 = arith.constant 0 : index
    %c1 = arith.constant 1 : index
    %c0_4 = arith.constant 0 : index
    %5 = vector.load %arg4[%c0_3, %c1, %c0_4] : memref<1x3x128xf32, #tpu.memory_space<vmem>>, vector<1x1x128xf32>
    %6 = vector.shape_cast %5 : vector<1x1x128xf32> to vector<1x128xf32>
    %c0_5 = arith.constant 0 : index
    %c2 = arith.constant 2 : index
    %c0_6 = arith.constant 0 : index
    %7 = vector.load %arg4[%c0_5, %c2, %c0_6] : memref<1x3x128xf32, #tpu.memory_space<vmem>>, vector<1x1x128xf32>
    %8 = vector.shape_cast %7 : vector<1x1x128xf32> to vector<1x128xf32>
    %cst = arith.constant 0.000000e+00 : f32
    %cst_7 = arith.constant 1.500000e+01 : f32
    %9 = vector.broadcast %cst : f32 to vector<1x128xf32>
    %10 = arith.maximumf %9, %4 : vector<1x128xf32>
    %11 = vector.broadcast %cst_7 : f32 to vector<1x128xf32>
    %12 = arith.minimumf %11, %10 : vector<1x128xf32>
    %cst_8 = arith.constant 0.000000e+00 : f32
    %cst_9 = arith.constant 7.000000e+00 : f32
    %13 = vector.broadcast %cst_8 : f32 to vector<1x128xf32>
    %14 = arith.maximumf %13, %6 : vector<1x128xf32>
    %15 = vector.broadcast %cst_9 : f32 to vector<1x128xf32>
    %16 = arith.minimumf %15, %14 : vector<1x128xf32>
    %cst_10 = arith.constant 0.000000e+00 : f32
    %cst_11 = arith.constant 1.500000e+01 : f32
    %17 = vector.broadcast %cst_10 : f32 to vector<1x128xf32>
    %18 = arith.maximumf %17, %8 : vector<1x128xf32>
    %19 = vector.broadcast %cst_11 : f32 to vector<1x128xf32>
    %20 = arith.minimumf %19, %18 : vector<1x128xf32>
    %21 = math.floor %12 : vector<1x128xf32>
    %22 = math.floor %16 : vector<1x128xf32>
    %23 = math.floor %20 : vector<1x128xf32>
    %24 = arith.subf %12, %21 : vector<1x128xf32>
    %25 = arith.subf %16, %22 : vector<1x128xf32>
    %26 = arith.subf %20, %23 : vector<1x128xf32>
    %27 = arith.fptosi %21 : vector<1x128xf32> to vector<1x128xi32>
    %28 = arith.fptosi %22 : vector<1x128xf32> to vector<1x128xi32>
    %29 = arith.fptosi %23 : vector<1x128xf32> to vector<1x128xi32>
    %c1_i32 = arith.constant 1 : i32
    %30 = vector.broadcast %c1_i32 : i32 to vector<1x128xi32>
    %31 = arith.addi %27, %30 : vector<1x128xi32>
    %c15_i32 = arith.constant 15 : i32
    %32 = vector.broadcast %c15_i32 : i32 to vector<1x128xi32>
    %33 = arith.minsi %31, %32 : vector<1x128xi32>
    %c1_i32_12 = arith.constant 1 : i32
    %34 = vector.broadcast %c1_i32_12 : i32 to vector<1x128xi32>
    %35 = arith.addi %28, %34 : vector<1x128xi32>
    %c7_i32 = arith.constant 7 : i32
    %36 = vector.broadcast %c7_i32 : i32 to vector<1x128xi32>
    %37 = arith.minsi %35, %36 : vector<1x128xi32>
    %c1_i32_13 = arith.constant 1 : i32
    %38 = vector.broadcast %c1_i32_13 : i32 to vector<1x128xi32>
    %39 = arith.addi %29, %38 : vector<1x128xi32>
    %c15_i32_14 = arith.constant 15 : i32
    %40 = vector.broadcast %c15_i32_14 : i32 to vector<1x128xi32>
    %41 = arith.minsi %39, %40 : vector<1x128xi32>
    %c8_i32 = arith.constant 8 : i32
    %42 = arith.muli %arg2, %c8_i32 : i32
    %43 = tpu.iota {dimensions = array<i32: 0>} : vector<8x128xi32>
    %44 = vector.broadcast %42 : i32 to vector<8x128xi32>
    %45 = arith.addi %43, %44 : vector<8x128xi32>
    %46 = vector.broadcast %27 : vector<1x128xi32> to vector<8x128xi32>
    %47 = arith.cmpi eq, %45, %46 : vector<8x128xi32>
    %cst_15 = arith.constant 1.000000e+00 : f32
    %48 = vector.broadcast %cst_15 : f32 to vector<1x128xf32>
    %49 = arith.subf %48, %24 : vector<1x128xf32>
    %cst_16 = arith.constant 0.000000e+00 : f32
    %50 = vector.shape_cast %49 : vector<1x128xf32> to vector<1x128xf32>
    %51 = vector.broadcast %50 : vector<1x128xf32> to vector<8x128xf32>
    %52 = vector.broadcast %cst_16 : f32 to vector<8x128xf32>
    %53 = arith.select %47, %51, %52 : vector<8x128xi1>, vector<8x128xf32>
    %54 = vector.broadcast %33 : vector<1x128xi32> to vector<8x128xi32>
    %55 = arith.cmpi eq, %45, %54 : vector<8x128xi32>
    %cst_17 = arith.constant 0.000000e+00 : f32
    %56 = vector.shape_cast %24 : vector<1x128xf32> to vector<1x128xf32>
    %57 = vector.broadcast %56 : vector<1x128xf32> to vector<8x128xf32>
    %58 = vector.broadcast %cst_17 : f32 to vector<8x128xf32>
    %59 = arith.select %55, %57, %58 : vector<8x128xi1>, vector<8x128xf32>
    %60 = arith.addf %53, %59 : vector<8x128xf32>
    %61 = tpu.iota {dimensions = array<i32: 0>} : vector<8x128xi32>
    %c0_i32_18 = arith.constant 0 : i32
    %62 = vector.broadcast %c0_i32_18 : i32 to vector<8x128xi32>
    %63 = arith.addi %61, %62 : vector<8x128xi32>
    %64 = vector.broadcast %28 : vector<1x128xi32> to vector<8x128xi32>
    %65 = arith.cmpi eq, %63, %64 : vector<8x128xi32>
    %cst_19 = arith.constant 1.000000e+00 : f32
    %66 = vector.broadcast %cst_19 : f32 to vector<1x128xf32>
    %67 = arith.subf %66, %25 : vector<1x128xf32>
    %cst_20 = arith.constant 0.000000e+00 : f32
    %68 = vector.shape_cast %67 : vector<1x128xf32> to vector<1x128xf32>
    %69 = vector.broadcast %68 : vector<1x128xf32> to vector<8x128xf32>
    %70 = vector.broadcast %cst_20 : f32 to vector<8x128xf32>
    %71 = arith.select %65, %69, %70 : vector<8x128xi1>, vector<8x128xf32>
    %72 = vector.broadcast %37 : vector<1x128xi32> to vector<8x128xi32>
    %73 = arith.cmpi eq, %63, %72 : vector<8x128xi32>
    %cst_21 = arith.constant 0.000000e+00 : f32
    %74 = vector.shape_cast %25 : vector<1x128xf32> to vector<1x128xf32>
    %75 = vector.broadcast %74 : vector<1x128xf32> to vector<8x128xf32>
    %76 = vector.broadcast %cst_21 : f32 to vector<8x128xf32>
    %77 = arith.select %73, %75, %76 : vector<8x128xi1>, vector<8x128xf32>
    %78 = arith.addf %71, %77 : vector<8x128xf32>
    %79 = tpu.iota {dimensions = array<i32: 0>} : vector<16x128xi32>
    %c0_i32_22 = arith.constant 0 : i32
    %80 = vector.broadcast %c0_i32_22 : i32 to vector<16x128xi32>
    %81 = arith.addi %79, %80 : vector<16x128xi32>
    %82 = vector.broadcast %29 : vector<1x128xi32> to vector<16x128xi32>
    %83 = arith.cmpi eq, %81, %82 : vector<16x128xi32>
    %cst_23 = arith.constant 1.000000e+00 : f32
    %84 = vector.broadcast %cst_23 : f32 to vector<1x128xf32>
    %85 = arith.subf %84, %26 : vector<1x128xf32>
    %cst_24 = arith.constant 0.000000e+00 : f32
    %86 = vector.shape_cast %85 : vector<1x128xf32> to vector<1x128xf32>
    %87 = vector.broadcast %86 : vector<1x128xf32> to vector<16x128xf32>
    %88 = vector.broadcast %cst_24 : f32 to vector<16x128xf32>
    %89 = arith.select %83, %87, %88 : vector<16x128xi1>, vector<16x128xf32>
    %90 = vector.broadcast %41 : vector<1x128xi32> to vector<16x128xi32>
    %91 = arith.cmpi eq, %81, %90 : vector<16x128xi32>
    %cst_25 = arith.constant 0.000000e+00 : f32
    %92 = vector.shape_cast %26 : vector<1x128xf32> to vector<1x128xf32>
    %93 = vector.broadcast %92 : vector<1x128xf32> to vector<16x128xf32>
    %94 = vector.broadcast %cst_25 : f32 to vector<16x128xf32>
    %95 = arith.select %91, %93, %94 : vector<16x128xi1>, vector<16x128xf32>
    %96 = arith.addf %89, %95 : vector<16x128xf32>
    %97 = vector.shape_cast %60 : vector<8x128xf32> to vector<8x1x128xf32>
    %98 = vector.shape_cast %78 : vector<8x128xf32> to vector<1x8x128xf32>
    %99 = vector.broadcast %97 : vector<8x1x128xf32> to vector<8x8x128xf32>
    %100 = vector.broadcast %98 : vector<1x8x128xf32> to vector<8x8x128xf32>
    %101 = arith.mulf %99, %100 : vector<8x8x128xf32>
    %102 = vector.shape_cast %101 : vector<8x8x128xf32> to vector<64x128xf32>
    %103 = vector.shape_cast %102 : vector<64x128xf32> to vector<64x1x128xf32>
    %104 = vector.shape_cast %96 : vector<16x128xf32> to vector<1x16x128xf32>
    %105 = vector.broadcast %103 : vector<64x1x128xf32> to vector<64x16x128xf32>
    %106 = vector.broadcast %104 : vector<1x16x128xf32> to vector<64x16x128xf32>
    %107 = arith.mulf %105, %106 : vector<64x16x128xf32>
    %108 = vector.shape_cast %107 : vector<64x16x128xf32> to vector<1024x128xf32>
    %c0_26 = arith.constant 0 : index
    %c0_27 = arith.constant 0 : index
    %c0_28 = arith.constant 0 : index
    %109 = vector.load %arg3[%c0_26, %c0_27, %c0_28] : memref<1x4x1024xf32, #tpu.memory_space<vmem>>, vector<1x4x1024xf32>
    %110 = vector.shape_cast %109 : vector<1x4x1024xf32> to vector<4x1024xf32>
    %c0_29 = arith.constant 0 : index
    %c0_30 = arith.constant 0 : index
    %111 = vector.load %arg6[%c0_29, %c0_30] : memref<4x128xf32, #tpu.memory_space<vmem>>, vector<4x128xf32>
    %cst_31 = arith.constant dense<0.000000e+00> : vector<4x128xf32>
    %112 = tpu.matmul %110, %108, %cst_31 {dimension_numbers = #tpu.dot_dimension_numbers<[1], [0], [0], [1], [0, 0, 1, 1], [], []>} : vector<4x1024xf32>, vector<1024x128xf32>, vector<4x128xf32> -> vector<4x128xf32>
    %113 = arith.addf %111, %112 : vector<4x128xf32>
    %c0_32 = arith.constant 0 : index
    %c0_33 = arith.constant 0 : index
    %114 = vector.load %arg6[%c0_32, %c0_33] : memref<4x128xf32, #tpu.memory_space<vmem>>, vector<4x128xf32>
    tpu.vector_store %arg6[%c0_32, %c0_33], %113 {strides = array<i32>} : memref<4x128xf32, #tpu.memory_space<vmem>>, vector<4x128xf32>,
    %c1_i32_34 = arith.constant 1 : i32
    %115 = arith.cmpi eq, %arg2, %c1_i32_34 : i32
    %116 = arith.extui %115 : i1 to i32
    %c0_i32_35 = arith.constant 0 : i32
    %117 = arith.cmpi ne, %116, %c0_i32_35 : i32
    scf.if %117 {
      %c0_36 = arith.constant 0 : index
      %c0_37 = arith.constant 0 : index
      %118 = vector.load %arg6[%c0_36, %c0_37] : memref<4x128xf32, #tpu.memory_space<vmem>>, vector<4x128xf32>
      %c0_38 = arith.constant 0 : index
      %c0_39 = arith.constant 0 : index
      %c0_40 = arith.constant 0 : index
      %119 = vector.load %arg5[%c0_38, %c0_39, %c0_40] : memref<1x4x128xf32, #tpu.memory_space<vmem>>, vector<1x4x128xf32>
      %120 = vector.shape_cast %119 : vector<1x4x128xf32> to vector<4x128xf32>
      %121 = vector.shape_cast %118 : vector<4x128xf32> to vector<1x4x128xf32>
      tpu.vector_store %arg5[%c0_38, %c0_39, %c0_40], %121 {strides = array<i32>} : memref<1x4x128xf32, #tpu.memory_space<vmem>>, vector<1x4x128xf32>,
    } else {
    }
    return
  }
  func.func @transform_0(%arg0: i32, %arg1: i32, %arg2: i32) -> (i32, i32, i32) {
    %c0_i32 = arith.constant 0 : i32
    %c0_i32_0 = arith.constant 0 : i32
    return %arg0, %c0_i32, %arg2 : i32, i32, i32
  }
  func.func @transform_1(%arg0: i32, %arg1: i32, %arg2: i32) -> (i32, i32, i32) {
    %c0_i32 = arith.constant 0 : i32
    %c0_i32_0 = arith.constant 0 : i32
    return %arg0, %c0_i32, %arg1 : i32, i32, i32
  }
  func.func @transform_2(%arg0: i32, %arg1: i32, %arg2: i32) -> (i32, i32, i32) {
    %c0_i32 = arith.constant 0 : i32
    %c0_i32_0 = arith.constant 0 : i32
    return %arg0, %c0_i32, %arg1 : i32, i32, i32
  }
}

</mosaic_0001>

<llo_original>
// kernel: tpu_custom_call.1
$region0: #{tpu_custom_call.1}
  #allocation0 [shape = 'u32[]', space=smem, size = 0x4, offset = 0x4, fixed_abs, tag = 'smem constant byte address 0x4 - core index']
  #allocation1 [shape = 'u32[144,128]{1,0:T(1,128)}', space=vmem, size = 0x12000, scoped, tag = 'internal scratch']
  #allocation2 [shape = 'f32[4,128]{1,0:T(4,128)}', space=vmem, size = 0x800, scoped, tag = 'scratch operand']
  %s0 = inlined_call_operand.hbm [shape: f32[2,4,2048], index: 0, kind: input, shape index: {}]
  %s1 = inlined_call_operand.vmem [shape: f32[2,3,256], index: 1, kind: input, shape index: {}]
  %s2 = inlined_call_operand.hbm [shape: f32[2,4,256], index: 2, kind: output, shape index: {}]
  %s3 = sld [smem:[#allocation0]]
  $region53: #{tpu_custom_call.1} parent=0
    _
  %s5 = ssub.s32 1, %s3
  %s6 = scalar_select 0, %s5, %s3
  $region1: #{tpu_custom_call.1} parent=0
    #allocation3 [shape = 'u8[32768]{0}', space=vmem, size = 0x8000, scoped, tag = 'input window, operand 0']
    #allocation4 [shape = 's32[2]{0}', space=sflag, size = 0x8, scoped, tag = 'scoped memory for tpu_custom_call.1']
    #allocation5 [shape = 's32[2]{0}', space=sflag, size = 0x8, scoped, tag = 'scoped memory for tpu_custom_call.1']
    #allocation6 [shape = 'u8[4096]{0}', space=vmem, size = 0x1000, scoped, tag = 'output window, operand 0']
    %7 = vsyncpa [#allocation4], 0
    %s8 = scalar_lea.sflag [#allocation4], 1
    %9 = vsyncpa %s8, 0
    %10 = vsyncpa [#allocation5], 0
    %s11 = scalar_lea.sflag [#allocation5], 1
    %12 = vsyncpa %s11, 0
    loop: start=0, step=1, limit=10
    $region2: #{tpu_custom_call.1} parent=1 // loop_pre_header
      _
    $region3: #{tpu_custom_call.1} parent=1 // loop_header
      %s14 = sphi 0, %s18
      %p15 = scmp.ge.s32.totalorder %s14, 10
      %s21 = sphi 0, %s40
      %s22 = sphi 0, %s36
      %s23 = sphi 0, %s32
      %s24 = sphi 0, %s21
      %s25 = sphi 0, %s22
      %s26 = sphi 0, %s23
      %s27 = sphi 0, %s24
      %s28 = sphi 0, %s25
      %s29 = sphi 0, %s26
      %s45 = sphi 0, %s47
      %s48 = sphi 0, %s45
      %s49 = sphi 0, %s48
      %s65 = sphi 0, %s49
      %s73 = sphi 0, %s75
      %s76 = sphi 0, %s73
      %s77 = sphi 0, %s76
      %s93 = sphi 0, %s77
      %s101 = sphi 0, %s103
      %s104 = sphi 0, %s101
      %s105 = sphi 0, %s104
      %s121 = sphi 0, %s105
    $region4: #{tpu_custom_call.1} parent=1 // loop_header_branch
      %17 = sbr.rel (%p15) target = $region8
    $region5: #{tpu_custom_call.1} parent=1 // loop_body
      %s19 = ssub.s32 %s14, 1
      %s20 = ssub.s32 %s14, 2
      %s30 = sadd.s32 1, %s23
      %p31 = scmp.ge.s32.totalorder %s30, 2
      %s32 = scalar_select %p31, 0, %s30
      %s33 = sadd.s32 1, %s22
      %s34 = scalar_select %p31, %s33, %s22
      %p35 = scmp.ge.s32.totalorder %s34, 2
      %s36 = scalar_select %p35, 0, %s34
      %s37 = sadd.s32 1, %s21
      %s38 = scalar_select %p35, %s37, %s21
      %p39 = scmp.ge.s32.totalorder %s38, 2
      %s40 = scalar_select %p39, 0, %s38
      %s41 = ssub.s32 %s21, %s40
      %s42 = ssub.s32 %s23, %s32
      %s43 = sor.u32 %s41, %s42
      %p44 = scmp.eq.s32.totalorder %s43, 0
      %s46 = sadd.s32 %s45, 1
      %s47 = scalar_select %p44, %s45, %s46
      %p50 = pneg %p44
      %p51 = scmp.eq.s32.totalorder %s14, 7
      %p52 = por %p50, %p51
      %p53 = scmp.ne.s32.totalorder %s45, %s48
      %p54 = scmp.eq.s32.totalorder %s14, 0
      %p55 = por %p53, %p54
      %p56 = scmp.ne.s32.totalorder %s45, %s48
      %p57 = scmp.eq.s32.totalorder %s19, 7
      %p58 = por %p56, %p57
      %p59 = scmp.ne.s32.totalorder %s48, %s49
      %p60 = scmp.eq.s32.totalorder %s19, 0
      %p61 = por %p59, %p60
      %p62 = scmp.ne.s32.totalorder %s48, %s49
      %p63 = scmp.eq.s32.totalorder %s20, 7
      %p64 = por %p62, %p63
      %p66 = scmp.ne.s32.totalorder %s49, %s65
      %p67 = scmp.eq.s32.totalorder %s20, 0
      %p68 = por %p66, %p67
      %s69 = ssub.s32 %s21, %s40
      %s70 = ssub.s32 %s22, %s36
      %s71 = sor.u32 %s69, %s70
      %p72 = scmp.eq.s32.totalorder %s71, 0
      %s74 = sadd.s32 %s73, 1
      %s75 = scalar_select %p72, %s73, %s74
      %p78 = pneg %p72
      %p79 = scmp.eq.s32.totalorder %s14, 7
      %p80 = por %p78, %p79
      %p81 = scmp.ne.s32.totalorder %s73, %s76
      %p82 = scmp.eq.s32.totalorder %s14, 0
      %p83 = por %p81, %p82
      %p84 = scmp.ne.s32.totalorder %s73, %s76
      %p85 = scmp.eq.s32.totalorder %s19, 7
      %p86 = por %p84, %p85
      %p87 = scmp.ne.s32.totalorder %s76, %s77
      %p88 = scmp.eq.s32.totalorder %s19, 0
      %p89 = por %p87, %p88
      %p90 = scmp.ne.s32.totalorder %s76, %s77
      %p91 = scmp.eq.s32.totalorder %s20, 7
      %p92 = por %p90, %p91
      %p94 = scmp.ne.s32.totalorder %s77, %s93
      %p95 = scmp.eq.s32.totalorder %s20, 0
      %p96 = por %p94, %p95
      %s97 = ssub.s32 %s21, %s40
      %s98 = ssub.s32 %s22, %s36
      %s99 = sor.u32 %s97, %s98
      %p100 = scmp.eq.s32.totalorder %s99, 0
      %s102 = sadd.s32 %s101, 1
      %s103 = scalar_select %p100, %s101, %s102
      %p106 = pneg %p100
      %p107 = scmp.eq.s32.totalorder %s14, 7
      %p108 = por %p106, %p107
      %p109 = scmp.ne.s32.totalorder %s101, %s104
      %p110 = scmp.eq.s32.totalorder %s14, 0
      %p111 = por %p109, %p110
      %p112 = scmp.ne.s32.totalorder %s101, %s104
      %p113 = scmp.eq.s32.totalorder %s19, 7
      %p114 = por %p112, %p113
      %p115 = scmp.ne.s32.totalorder %s104, %s105
      %p116 = scmp.eq.s32.totalorder %s19, 0
      %p117 = por %p115, %p116
      %p118 = scmp.ne.s32.totalorder %s104, %s105
      %p119 = scmp.eq.s32.totalorder %s20, 7
      %p120 = por %p118, %p119
      %p122 = scmp.ne.s32.totalorder %s105, %s121
      %p123 = scmp.eq.s32.totalorder %s20, 0
      %p124 = por %p122, %p123
      %p125 = scmp.le.s32.totalorder 1, %s14
      %p126 = scmp.lt.s32.totalorder %s14, 9
      %p127 = pnand %p125, %p126
      %p128 = pneg %p127
      // Predicated region
      $region9: #{tpu_custom_call.1} parent=5 // pred_check
        _
      $region10: #{tpu_custom_call.1} parent=5 // pred_check_branch
        %130 = sbr.rel (%p127) target = $region12
      $region11: #{tpu_custom_call.1} parent=5 // pred_region
        %s131 = ssub.s32 %s14, 1
      $region12: #{tpu_custom_call.1} parent=5 // pred_fallthru
        _
      %p132 = scmp.lt.s32.totalorder %s14, 8
      // Predicated region
      $region13: #{tpu_custom_call.1} parent=5 // pred_check
        %p133 = pneg %p132
      $region14: #{tpu_custom_call.1} parent=5 // pred_check_branch
        %135 = sbr.rel (%p133) target = $region16
      $region15: #{tpu_custom_call.1} parent=5 // pred_region
        // Predicated region
        $region17: #{tpu_custom_call.1} parent=15 // pred_check
          %p136 = pneg %p55
        $region18: #{tpu_custom_call.1} parent=15 // pred_check_branch
          %138 = sbr.rel (%p136) target = $region20
        $region19: #{tpu_custom_call.1} parent=15 // pred_region
          %s139 = sand.u32 %s45, 1
          %s140 = scalar_lea.sflag [#allocation4], %s139
          %s141 = sand.u32 %s45, 1
          %s142 = smul.addr %s141, 32
          %s143 = scalar_lea.vmem [#allocation3], %s142
          %s144 = smul.u32 8, %s23
          %s146 = ssub.s32 512, 512
          %147 = vsyncadd %s140, %s146
          %s148 = smul.addr %s21, 16
          %s149 = sadd.s32 %s144, %s148
          %s150 = smul.addr %s149, 64
          %s151 = scalar_lea.hbm %s0, %s150
          %s153 = sshll.u32 %s143, 4
          %s154 = int_to_ptr.vmem [resolvable:$true] %s153
          %156 = dma.hbm_to_vmem [thread:$0]  %s151, 512, %s154, %s140
        $region20: #{tpu_custom_call.1} parent=15 // pred_fallthru
          _
        // Predicated region
        $region21: #{tpu_custom_call.1} parent=15 // pred_check
          %p157 = pneg %p83
        $region22: #{tpu_custom_call.1} parent=15 // pred_check_branch
          %159 = sbr.rel (%p157) target = $region24
        $region23: #{tpu_custom_call.1} parent=15 // pred_region
          %p160 = scmp.lt.s32.totalorder %s21, 1
          %s161 = scalar_select %p160, %s21, 1
          %p162 = scmp.lt.s32.totalorder %s22, 1
          %s163 = scalar_select %p162, %s22, 1
          %s164 = smul.addr %s161, 2
          %s165 = sadd.s32 %s163, %s164
          %s166 = smul.addr %s165, 4
          %s167 = scalar_lea.vmem %s1, %s166
        $region24: #{tpu_custom_call.1} parent=15 // pred_fallthru
          _
      $region16: #{tpu_custom_call.1} parent=5 // pred_fallthru
        _
      %p168 = scmp.le.s32.totalorder 1, %s14
      %p169 = scmp.lt.s32.totalorder %s14, 9
      %p170 = pnand %p168, %p169
      %p171 = pneg %p170
      // Predicated region
      $region25: #{tpu_custom_call.1} parent=5 // pred_check
        _
      $region26: #{tpu_custom_call.1} parent=5 // pred_check_branch
        %173 = sbr.rel (%p170) target = $region28
      $region27: #{tpu_custom_call.1} parent=5 // pred_region
        %s174 = ssub.s32 %s14, 1
        %s175 = sand.u32 %s48, 1
        %s176 = scalar_lea.sflag [#allocation4], %s175
        %s177 = sand.u32 %s48, 1
        %s178 = smul.addr %s177, 32
        %s179 = scalar_lea.vmem [#allocation3], %s178
        // Predicated region
        $region29: #{tpu_custom_call.1} parent=27 // pred_check
          %p180 = pneg %p61
        $region30: #{tpu_custom_call.1} parent=27 // pred_check_branch
          %182 = sbr.rel (%p180) target = $region32
        $region31: #{tpu_custom_call.1} parent=27 // pred_region
          %183 = dma.done %s176, 512
        $region32: #{tpu_custom_call.1} parent=27 // pred_fallthru
          _
        %s184 = sand.u32 %s48, 1
        %s185 = scalar_lea.sflag [#allocation4], %s184
        %s186 = sand.u32 %s48, 1
        %s187 = smul.addr %s186, 32
        %s188 = scalar_lea.vmem [#allocation3], %s187
        %p189 = pneg %p61
        %p190 = pneg %p58
        %p191 = scmp.lt.s32.totalorder %s24, 1
        %s192 = scalar_select %p191, %s24, 1
        %p193 = scmp.lt.s32.totalorder %s25, 1
        %s194 = scalar_select %p193, %s25, 1
        %s195 = smul.addr %s192, 2
        %s196 = sadd.s32 %s194, %s195
        %s197 = smul.addr %s196, 4
        %s198 = scalar_lea.vmem %s1, %s197
        %p199 = pneg %p89
        %p200 = pneg %p86
        %p201 = pneg %p117
        %p202 = pneg %p114
        %s203 = sand.u32 %s104, 1
        %s204 = scalar_lea.sflag [#allocation5], %s203
        %s205 = sand.u32 %s104, 1
        %s206 = smul.addr %s205, 4
        %s207 = scalar_lea.vmem [#allocation6], %s206
        %s208 = smul.u32 8, %s26
        %p209 = scmp.lt.s32.totalorder %s24, 1
        %s210 = scalar_select %p209, %s24, 1
        %p211 = scmp.lt.s32.totalorder %s25, 1
        %s212 = scalar_select %p211, %s25, 1
        %s213 = smul.addr %s210, 2
        %s214 = sadd.s32 %s212, %s213
        %s215 = smul.addr %s214, 4
        %s216 = scalar_lea.vmem %s1, %s215
        %p217 = scmp.eq.s32.totalorder %s26, 0
        // Predicated region
        $region33: #{tpu_custom_call.1} parent=27 // pred_check
          %p218 = pneg %p217
        $region34: #{tpu_custom_call.1} parent=27 // pred_check_branch
          %220 = sbr.rel (%p218) target = $region36
        $region35: #{tpu_custom_call.1} parent=27 // pred_region
          %221 = vst [vmem:[#allocation2] sm:$0xf] 0.0
        $region36: #{tpu_custom_call.1} parent=27 // pred_fallthru
          _
        %v222 = vld [vmem:[%s216] sm:$0x1]
        %v223 = vld [vmem:[%s216 + $0x1] sm:$0x1]
        %v224 = vld [vmem:[%s216 + $0x2] sm:$0x1]
        %v225 = vmax.f32 %v222, 0.0
        %v226 = vmin.f32 %v225, 15.0
        %v227 = vmax.f32 %v223, 0.0
        %v228 = vmin.f32 %v227, 7.0
        %v229 = vmax.f32 %v224, 0.0
        %v230 = vmin.f32 %v229, 15.0
        %v231 = vfloor.f32 %v226
        %v232 = vfloor.f32 %v228
        %v233 = vfloor.f32 %v230
        %v234 = vsub.f32 %v226, %v231
        %v235 = vsub.f32 %v228, %v232
        %v236 = vsub.f32 %v230, %v233
        %v237 = vcvt.f32.s32.to.zero.pseudo %v231
        %v238 = vcvt.f32.s32.to.zero.pseudo %v232
        %v239 = vcvt.f32.s32.to.zero.pseudo %v233
        %v240 = vadd.s32 %v237, 1
        %vm241 = vcmp.lt.s32.totalorder %v240, 15
        %v242 = vsel %vm241, %v240, 15
        %v243 = vadd.s32 %v238, 1
        %vm244 = vcmp.lt.s32.totalorder %v243, 7
        %v245 = vsel %vm244, %v243, 7
        %v246 = vadd.s32 %v239, 1
        %vm247 = vcmp.lt.s32.totalorder %v246, 15
        %v248 = vsel %vm247, %v246, 15
        %s249 = smul.u32 %s26, 8
        %v250 = vlaneseq
        %v251 = vshrl.u32 %v250, 7
        %v252 = vstv %s249
        %v253 = vadd.s32 %v251, %v252
        %v254 = vlaneseq
        %v255 = vshrl.u32 %v254, 7
        %v256 = vsub.s32 0, %v255
        %v257 = vrot.slane %v237, %v256
        %vm258 = vcmp.eq.s32.totalorder %v253, %v257
        %v259 = vsub.f32 1.0, %v234
        %v260 = vlaneseq
        %v261 = vshrl.u32 %v260, 7
        %v262 = vsub.s32 0, %v261
        %v263 = vrot.slane %v259, %v262
        %v264 = vsel %vm258, %v263, 0.0
        %v265 = vlaneseq
        %v266 = vshrl.u32 %v265, 7
        %v267 = vsub.s32 0, %v266
        %v268 = vrot.slane %v242, %v267
        %vm269 = vcmp.eq.s32.totalorder %v253, %v268
        %v270 = vlaneseq
        %v271 = vshrl.u32 %v270, 7
        %v272 = vsub.s32 0, %v271
        %v273 = vrot.slane %v234, %v272
        %v274 = vsel %vm269, %v273, 0.0
        %v275 = vadd.f32 %v264, %v274
        %v276 = vlaneseq
        %v277 = vshrl.u32 %v276, 7
        %v278 = vsub.s32 0, %v277
        %v279 = vrot.slane %v238, %v278
        %vm280 = vcmp.eq.s32.totalorder %v251, %v279
        %v281 = vsub.f32 1.0, %v235
        %v282 = vlaneseq
        %v283 = vshrl.u32 %v282, 7
        %v284 = vsub.s32 0, %v283
        %v285 = vrot.slane %v281, %v284
        %v286 = vsel %vm280, %v285, 0.0
        %v287 = vlaneseq
        %v288 = vshrl.u32 %v287, 7
        %v289 = vsub.s32 0, %v288
        %v290 = vrot.slane %v245, %v289
        %vm291 = vcmp.eq.s32.totalorder %v251, %v290
        %v292 = vlaneseq
        %v293 = vshrl.u32 %v292, 7
        %v294 = vsub.s32 0, %v293
        %v295 = vrot.slane %v235, %v294
        %v296 = vsel %vm291, %v295, 0.0
        %v297 = vadd.f32 %v286, %v296
        %v298 = vadd.s32 %v251, 8
        %v299 = vlaneseq
        %v300 = vshrl.u32 %v299, 7
        %v301 = vsub.s32 0, %v300
        %v302 = vrot.slane %v239, %v301
        %vm303 = vcmp.eq.s32.totalorder %v251, %v302
        %vm304 = vcmp.eq.s32.totalorder %v298, %v302
        %v305 = vsub.f32 1.0, %v236
        %v306 = vlaneseq
        %v307 = vshrl.u32 %v306, 7
        %v308 = vsub.s32 0, %v307
        %v309 = vrot.slane %v305, %v308
        %v310 = vsel %vm303, %v309, 0.0
        %v311 = vsel %vm304, %v309, 0.0
        %v312 = vlaneseq
        %v313 = vshrl.u32 %v312, 7
        %v314 = vsub.s32 0, %v313
        %v315 = vrot.slane %v248, %v314
        %vm316 = vcmp.eq.s32.totalorder %v251, %v315
        %vm317 = vcmp.eq.s32.totalorder %v298, %v315
        %v318 = vlaneseq
        %v319 = vshrl.u32 %v318, 7
        %v320 = vsub.s32 0, %v319
        %v321 = vrot.slane %v236, %v320
        %v322 = vsel %vm316, %v321, 0.0
        %v323 = vsel %vm317, %v321, 0.0
        %v324 = vadd.f32 %v310, %v322
        %v325 = vadd.f32 %v311, %v323
        %v327 = vcombine.high %v275, %v275
        %v329 = vunpack.c.l.s4 1966171168
        %v330 = vunpack.c.0.s8 %v329
        %v331 = vlaneseq
        %v332 = vshrl.u32 %v331, 7
        %v333 = vsub.s32 %v330, %v332
        %v334 = vrot.slane %v275, %v333
        %v336 = vunpack.c.l.s4 1966171168
        %v337 = vunpack.c.0.s8 %v336
        %v338 = vlaneseq
        %v339 = vshrl.u32 %v338, 7
        %v340 = vsub.s32 %v337, %v339
        %v341 = vrot.slane %v327, %v340
        %v342 = vcombine.high %v334, %v334
        %v343 = vcombine.high %v341, %v341
        %v345 = vunpack.c.l.s4 1966171168
        %v346 = vunpack.c.0.s8 %v345
        %v347 = vlaneseq
        %v348 = vshrl.u32 %v347, 7
        %v349 = vsub.s32 %v346, %v348
        %v350 = vrot.slane %v334, %v349
        %v352 = vunpack.c.l.s4 1966171168
        %v353 = vunpack.c.0.s8 %v352
        %v354 = vlaneseq
        %v355 = vshrl.u32 %v354, 7
        %v356 = vsub.s32 %v353, %v355
        %v357 = vrot.slane %v341, %v356
        %v359 = vunpack.c.l.s4 1966171168
        %v360 = vunpack.c.0.s8 %v359
        %v361 = vlaneseq
        %v362 = vshrl.u32 %v361, 7
        %v363 = vsub.s32 %v360, %v362
        %v364 = vrot.slane %v342, %v363
        %v366 = vunpack.c.l.s4 1966171168
        %v367 = vunpack.c.0.s8 %v366
        %v368 = vlaneseq
        %v369 = vshrl.u32 %v368, 7
        %v370 = vsub.s32 %v367, %v369
        %v371 = vrot.slane %v343, %v370
        %v372 = vcombine.high %v350, %v350
        %v373 = vcombine.high %v357, %v357
        %v374 = vcombine.high %v364, %v364
        %v375 = vcombine.high %v371, %v371
        %v376 = vlaneseq
        %v377 = vshrl.u32 %v376, 7
        %v378 = vsub.s32 0, %v377
        %v379 = vrot.slane %v350, %v378
        %v380 = vlaneseq
        %v381 = vshrl.u32 %v380, 7
        %v382 = vsub.s32 0, %v381
        %v383 = vrot.slane %v364, %v382
        %v384 = vlaneseq
        %v385 = vshrl.u32 %v384, 7
        %v386 = vsub.s32 0, %v385
        %v387 = vrot.slane %v372, %v386
        %v388 = vlaneseq
        %v389 = vshrl.u32 %v388, 7
        %v390 = vsub.s32 0, %v389
        %v391 = vrot.slane %v374, %v390
        %v392 = vlaneseq
        %v393 = vshrl.u32 %v392, 7
        %v394 = vsub.s32 0, %v393
        %v395 = vrot.slane %v357, %v394
        %v396 = vlaneseq
        %v397 = vshrl.u32 %v396, 7
        %v398 = vsub.s32 0, %v397
        %v399 = vrot.slane %v371, %v398
        %v400 = vlaneseq
        %v401 = vshrl.u32 %v400, 7
        %v402 = vsub.s32 0, %v401
        %v403 = vrot.slane %v373, %v402
        %v404 = vlaneseq
        %v405 = vshrl.u32 %v404, 7
        %v406 = vsub.s32 0, %v405
        %v407 = vrot.slane %v375, %v406
        %v416 = vmul.f32 %v379, %v297
        %v417 = vmul.f32 %v383, %v297
        %v418 = vmul.f32 %v387, %v297
        %v419 = vmul.f32 %v391, %v297
        %v420 = vmul.f32 %v395, %v297
        %v421 = vmul.f32 %v399, %v297
        %v422 = vmul.f32 %v403, %v297
        %v423 = vmul.f32 %v407, %v297
        %v432 = vcombine.high %v416, %v416
        %v434 = vunpack.c.l.s4 1966171168
        %v435 = vunpack.c.0.s8 %v434
        %v436 = vlaneseq
        %v437 = vshrl.u32 %v436, 7
        %v438 = vsub.s32 %v435, %v437
        %v439 = vrot.slane %v416, %v438
        %v441 = vunpack.c.l.s4 1966171168
        %v442 = vunpack.c.0.s8 %v441
        %v443 = vlaneseq
        %v444 = vshrl.u32 %v443, 7
        %v445 = vsub.s32 %v442, %v444
        %v446 = vrot.slane %v432, %v445
        %v447 = vcombine.high %v439, %v439
        %v448 = vcombine.high %v446, %v446
        %v450 = vunpack.c.l.s4 1966171168
        %v451 = vunpack.c.0.s8 %v450
        %v452 = vlaneseq
        %v453 = vshrl.u32 %v452, 7
        %v454 = vsub.s32 %v451, %v453
        %v455 = vrot.slane %v439, %v454
        %v457 = vunpack.c.l.s4 1966171168
        %v458 = vunpack.c.0.s8 %v457
        %v459 = vlaneseq
        %v460 = vshrl.u32 %v459, 7
        %v461 = vsub.s32 %v458, %v460
        %v462 = vrot.slane %v446, %v461
        %v464 = vunpack.c.l.s4 1966171168
        %v465 = vunpack.c.0.s8 %v464
        %v466 = vlaneseq
        %v467 = vshrl.u32 %v466, 7
        %v468 = vsub.s32 %v465, %v467
        %v469 = vrot.slane %v447, %v468
        %v471 = vunpack.c.l.s4 1966171168
        %v472 = vunpack.c.0.s8 %v471
        %v473 = vlaneseq
        %v474 = vshrl.u32 %v473, 7
        %v475 = vsub.s32 %v472, %v474
        %v476 = vrot.slane %v448, %v475
        %v477 = vcombine.high %v455, %v455
        %v478 = vcombine.high %v462, %v462
        %v479 = vcombine.high %v469, %v469
        %v480 = vcombine.high %v476, %v476
        %v481 = vcombine.high %v417, %v417
        %v483 = vunpack.c.l.s4 1966171168
        %v484 = vunpack.c.0.s8 %v483
        %v485 = vlaneseq
        %v486 = vshrl.u32 %v485, 7
        %v487 = vsub.s32 %v484, %v486
        %v488 = vrot.slane %v417, %v487
        %v490 = vunpack.c.l.s4 1966171168
        %v491 = vunpack.c.0.s8 %v490
        %v492 = vlaneseq
        %v493 = vshrl.u32 %v492, 7
        %v494 = vsub.s32 %v491, %v493
        %v495 = vrot.slane %v481, %v494
        %v496 = vcombine.high %v488, %v488
        %v497 = vcombine.high %v495, %v495
        %v499 = vunpack.c.l.s4 1966171168
        %v500 = vunpack.c.0.s8 %v499
        %v501 = vlaneseq
        %v502 = vshrl.u32 %v501, 7
        %v503 = vsub.s32 %v500, %v502
        %v504 = vrot.slane %v488, %v503
        %v506 = vunpack.c.l.s4 1966171168
        %v507 = vunpack.c.0.s8 %v506
        %v508 = vlaneseq
        %v509 = vshrl.u32 %v508, 7
        %v510 = vsub.s32 %v507, %v509
        %v511 = vrot.slane %v495, %v510
        %v513 = vunpack.c.l.s4 1966171168
        %v514 = vunpack.c.0.s8 %v513
        %v515 = vlaneseq
        %v516 = vshrl.u32 %v515, 7
        %v517 = vsub.s32 %v514, %v516
        %v518 = vrot.slane %v496, %v517
        %v520 = vunpack.c.l.s4 1966171168
        %v521 = vunpack.c.0.s8 %v520
        %v522 = vlaneseq
        %v523 = vshrl.u32 %v522, 7
        %v524 = vsub.s32 %v521, %v523
        %v525 = vrot.slane %v497, %v524
        %v526 = vcombine.high %v504, %v504
        %v527 = vcombine.high %v511, %v511
        %v528 = vcombine.high %v518, %v518
        %v529 = vcombine.high %v525, %v525
        %v530 = vcombine.high %v418, %v418
        %v532 = vunpack.c.l.s4 1966171168
        %v533 = vunpack.c.0.s8 %v532
        %v534 = vlaneseq
        %v535 = vshrl.u32 %v534, 7
        %v536 = vsub.s32 %v533, %v535
        %v537 = vrot.slane %v418, %v536
        %v539 = vunpack.c.l.s4 1966171168
        %v540 = vunpack.c.0.s8 %v539
        %v541 = vlaneseq
        %v542 = vshrl.u32 %v541, 7
        %v543 = vsub.s32 %v540, %v542
        %v544 = vrot.slane %v530, %v543
        %v545 = vcombine.high %v537, %v537
        %v546 = vcombine.high %v544, %v544
        %v548 = vunpack.c.l.s4 1966171168
        %v549 = vunpack.c.0.s8 %v548
        %v550 = vlaneseq
        %v551 = vshrl.u32 %v550, 7
        %v552 = vsub.s32 %v549, %v551
        %v553 = vrot.slane %v537, %v552
        %v555 = vunpack.c.l.s4 1966171168
        %v556 = vunpack.c.0.s8 %v555
        %v557 = vlaneseq
        %v558 = vshrl.u32 %v557, 7
        %v559 = vsub.s32 %v556, %v558
        %v560 = vrot.slane %v544, %v559
        %v562 = vunpack.c.l.s4 1966171168
        %v563 = vunpack.c.0.s8 %v562
        %v564 = vlaneseq
        %v565 = vshrl.u32 %v564, 7
        %v566 = vsub.s32 %v563, %v565
        %v567 = vrot.slane %v545, %v566
        %v569 = vunpack.c.l.s4 1966171168
        %v570 = vunpack.c.0.s8 %v569
        %v571 = vlaneseq
        %v572 = vshrl.u32 %v571, 7
        %v573 = vsub.s32 %v570, %v572
        %v574 = vrot.slane %v546, %v573
        %v575 = vcombine.high %v553, %v553
        %v576 = vcombine.high %v560, %v560
        %v577 = vcombine.high %v567, %v567
        %v578 = vcombine.high %v574, %v574
        %v579 = vcombine.high %v419, %v419
        %v581 = vunpack.c.l.s4 1966171168
        %v582 = vunpack.c.0.s8 %v581
        %v583 = vlaneseq
        %v584 = vshrl.u32 %v583, 7
        %v585 = vsub.s32 %v582, %v584
        %v586 = vrot.slane %v419, %v585
        %v588 = vunpack.c.l.s4 1966171168
        %v589 = vunpack.c.0.s8 %v588
        %v590 = vlaneseq
        %v591 = vshrl.u32 %v590, 7
        %v592 = vsub.s32 %v589, %v591
        %v593 = vrot.slane %v579, %v592
        %v594 = vcombine.high %v586, %v586
        %v595 = vcombine.high %v593, %v593
        %v597 = vunpack.c.l.s4 1966171168
        %v598 = vunpack.c.0.s8 %v597
        %v599 = vlaneseq
        %v600 = vshrl.u32 %v599, 7
        %v601 = vsub.s32 %v598, %v600
        %v602 = vrot.slane %v586, %v601
        %v604 = vunpack.c.l.s4 1966171168
        %v605 = vunpack.c.0.s8 %v604
        %v606 = vlaneseq
        %v607 = vshrl.u32 %v606, 7
        %v608 = vsub.s32 %v605, %v607
        %v609 = vrot.slane %v593, %v608
        %v611 = vunpack.c.l.s4 1966171168
        %v612 = vunpack.c.0.s8 %v611
        %v613 = vlaneseq
        %v614 = vshrl.u32 %v613, 7
        %v615 = vsub.s32 %v612, %v614
        %v616 = vrot.slane %v594, %v615
        %v618 = vunpack.c.l.s4 1966171168
        %v619 = vunpack.c.0.s8 %v618
        %v620 = vlaneseq
        %v621 = vshrl.u32 %v620, 7
        %v622 = vsub.s32 %v619, %v621
        %v623 = vrot.slane %v595, %v622
        %v624 = vcombine.high %v602, %v602
        %v625 = vcombine.high %v609, %v609
        %v626 = vcombine.high %v616, %v616
        %v627 = vcombine.high %v623, %v623
        %v628 = vcombine.high %v420, %v420
        %v630 = vunpack.c.l.s4 1966171168
        %v631 = vunpack.c.0.s8 %v630
        %v632 = vlaneseq
        %v633 = vshrl.u32 %v632, 7
        %v634 = vsub.s32 %v631, %v633
        %v635 = vrot.slane %v420, %v634
        %v637 = vunpack.c.l.s4 1966171168
        %v638 = vunpack.c.0.s8 %v637
        %v639 = vlaneseq
        %v640 = vshrl.u32 %v639, 7
        %v641 = vsub.s32 %v638, %v640
        %v642 = vrot.slane %v628, %v641
        %v643 = vcombine.high %v635, %v635
        %v644 = vcombine.high %v642, %v642
        %v646 = vunpack.c.l.s4 1966171168
        %v647 = vunpack.c.0.s8 %v646
        %v648 = vlaneseq
        %v649 = vshrl.u32 %v648, 7
        %v650 = vsub.s32 %v647, %v649
        %v651 = vrot.slane %v635, %v650
        %v653 = vunpack.c.l.s4 1966171168
        %v654 = vunpack.c.0.s8 %v653
        %v655 = vlaneseq
        %v656 = vshrl.u32 %v655, 7
        %v657 = vsub.s32 %v654, %v656
        %v658 = vrot.slane %v642, %v657
        %v660 = vunpack.c.l.s4 1966171168
        %v661 = vunpack.c.0.s8 %v660
        %v662 = vlaneseq
        %v663 = vshrl.u32 %v662, 7
        %v664 = vsub.s32 %v661, %v663
        %v665 = vrot.slane %v643, %v664
        %v667 = vunpack.c.l.s4 1966171168
        %v668 = vunpack.c.0.s8 %v667
        %v669 = vlaneseq
        %v670 = vshrl.u32 %v669, 7
        %v671 = vsub.s32 %v668, %v670
        %v672 = vrot.slane %v644, %v671
        %v673 = vcombine.high %v651, %v651
        %v674 = vcombine.high %v658, %v658
        %v675 = vcombine.high %v665, %v665
        %v676 = vcombine.high %v672, %v672
        %v677 = vcombine.high %v421, %v421
        %v679 = vunpack.c.l.s4 1966171168
        %v680 = vunpack.c.0.s8 %v679
        %v681 = vlaneseq
        %v682 = vshrl.u32 %v681, 7
        %v683 = vsub.s32 %v680, %v682
        %v684 = vrot.slane %v421, %v683
        %v686 = vunpack.c.l.s4 1966171168
        %v687 = vunpack.c.0.s8 %v686
        %v688 = vlaneseq
        %v689 = vshrl.u32 %v688, 7
        %v690 = vsub.s32 %v687, %v689
        %v691 = vrot.slane %v677, %v690
        %v692 = vcombine.high %v684, %v684
        %v693 = vcombine.high %v691, %v691
        %v695 = vunpack.c.l.s4 1966171168
        %v696 = vunpack.c.0.s8 %v695
        %v697 = vlaneseq
        %v698 = vshrl.u32 %v697, 7
        %v699 = vsub.s32 %v696, %v698
        %v700 = vrot.slane %v684, %v699
        %v702 = vunpack.c.l.s4 1966171168
        %v703 = vunpack.c.0.s8 %v702
        %v704 = vlaneseq
        %v705 = vshrl.u32 %v704, 7
        %v706 = vsub.s32 %v703, %v705
        %v707 = vrot.slane %v691, %v706
        %v709 = vunpack.c.l.s4 1966171168
        %v710 = vunpack.c.0.s8 %v709
        %v711 = vlaneseq
        %v712 = vshrl.u32 %v711, 7
        %v713 = vsub.s32 %v710, %v712
        %v714 = vrot.slane %v692, %v713
        %v716 = vunpack.c.l.s4 1966171168
        %v717 = vunpack.c.0.s8 %v716
        %v718 = vlaneseq
        %v719 = vshrl.u32 %v718, 7
        %v720 = vsub.s32 %v717, %v719
        %v721 = vrot.slane %v693, %v720
        %v722 = vcombine.high %v700, %v700
        %v723 = vcombine.high %v707, %v707
        %v724 = vcombine.high %v714, %v714
        %v725 = vcombine.high %v721, %v721
        %v726 = vcombine.high %v422, %v422
        %v728 = vunpack.c.l.s4 1966171168
        %v729 = vunpack.c.0.s8 %v728
        %v730 = vlaneseq
        %v731 = vshrl.u32 %v730, 7
        %v732 = vsub.s32 %v729, %v731
        %v733 = vrot.slane %v422, %v732
        %v735 = vunpack.c.l.s4 1966171168
        %v736 = vunpack.c.0.s8 %v735
        %v737 = vlaneseq
        %v738 = vshrl.u32 %v737, 7
        %v739 = vsub.s32 %v736, %v738
        %v740 = vrot.slane %v726, %v739
        %v741 = vcombine.high %v733, %v733
        %v742 = vcombine.high %v740, %v740
        %v744 = vunpack.c.l.s4 1966171168
        %v745 = vunpack.c.0.s8 %v744
        %v746 = vlaneseq
        %v747 = vshrl.u32 %v746, 7
        %v748 = vsub.s32 %v745, %v747
        %v749 = vrot.slane %v733, %v748
        %v751 = vunpack.c.l.s4 1966171168
        %v752 = vunpack.c.0.s8 %v751
        %v753 = vlaneseq
        %v754 = vshrl.u32 %v753, 7
        %v755 = vsub.s32 %v752, %v754
        %v756 = vrot.slane %v740, %v755
        %v758 = vunpack.c.l.s4 1966171168
        %v759 = vunpack.c.0.s8 %v758
        %v760 = vlaneseq
        %v761 = vshrl.u32 %v760, 7
        %v762 = vsub.s32 %v759, %v761
        %v763 = vrot.slane %v741, %v762
        %v765 = vunpack.c.l.s4 1966171168
        %v766 = vunpack.c.0.s8 %v765
        %v767 = vlaneseq
        %v768 = vshrl.u32 %v767, 7
        %v769 = vsub.s32 %v766, %v768
        %v770 = vrot.slane %v742, %v769
        %v771 = vcombine.high %v749, %v749
        %v772 = vcombine.high %v756, %v756
        %v773 = vcombine.high %v763, %v763
        %v774 = vcombine.high %v770, %v770
        %v775 = vcombine.high %v423, %v423
        %v777 = vunpack.c.l.s4 1966171168
        %v778 = vunpack.c.0.s8 %v777
        %v779 = vlaneseq
        %v780 = vshrl.u32 %v779, 7
        %v781 = vsub.s32 %v778, %v780
        %v782 = vrot.slane %v423, %v781
        %v784 = vunpack.c.l.s4 1966171168
        %v785 = vunpack.c.0.s8 %v784
        %v786 = vlaneseq
        %v787 = vshrl.u32 %v786, 7
        %v788 = vsub.s32 %v785, %v787
        %v789 = vrot.slane %v775, %v788
        %v790 = vcombine.high %v782, %v782
        %v791 = vcombine.high %v789, %v789
        %v793 = vunpack.c.l.s4 1966171168
        %v794 = vunpack.c.0.s8 %v793
        %v795 = vlaneseq
        %v796 = vshrl.u32 %v795, 7
        %v797 = vsub.s32 %v794, %v796
        %v798 = vrot.slane %v782, %v797
        %v800 = vunpack.c.l.s4 1966171168
        %v801 = vunpack.c.0.s8 %v800
        %v802 = vlaneseq
        %v803 = vshrl.u32 %v802, 7
        %v804 = vsub.s32 %v801, %v803
        %v805 = vrot.slane %v789, %v804
        %v807 = vunpack.c.l.s4 1966171168
        %v808 = vunpack.c.0.s8 %v807
        %v809 = vlaneseq
        %v810 = vshrl.u32 %v809, 7
        %v811 = vsub.s32 %v808, %v810
        %v812 = vrot.slane %v790, %v811
        %v814 = vunpack.c.l.s4 1966171168
        %v815 = vunpack.c.0.s8 %v814
        %v816 = vlaneseq
        %v817 = vshrl.u32 %v816, 7
        %v818 = vsub.s32 %v815, %v817
        %v819 = vrot.slane %v791, %v818
        %v820 = vcombine.high %v798, %v798
        %v821 = vcombine.high %v805, %v805
        %v822 = vcombine.high %v812, %v812
        %v823 = vcombine.high %v819, %v819
        %v824 = vlaneseq
        %v825 = vshrl.u32 %v824, 7
        %v826 = vsub.s32 0, %v825
        %v827 = vrot.slane %v455, %v826
        %v828 = vlaneseq
        %v829 = vshrl.u32 %v828, 7
        %v830 = vsub.s32 0, %v829
        %v831 = vrot.slane %v469, %v830
        %v832 = vlaneseq
        %v833 = vshrl.u32 %v832, 7
        %v834 = vsub.s32 0, %v833
        %v835 = vrot.slane %v477, %v834
        %v836 = vlaneseq
        %v837 = vshrl.u32 %v836, 7
        %v838 = vsub.s32 0, %v837
        %v839 = vrot.slane %v479, %v838
        %v840 = vlaneseq
        %v841 = vshrl.u32 %v840, 7
        %v842 = vsub.s32 0, %v841
        %v843 = vrot.slane %v462, %v842
        %v844 = vlaneseq
        %v845 = vshrl.u32 %v844, 7
        %v846 = vsub.s32 0, %v845
        %v847 = vrot.slane %v476, %v846
        %v848 = vlaneseq
        %v849 = vshrl.u32 %v848, 7
        %v850 = vsub.s32 0, %v849
        %v851 = vrot.slane %v478, %v850
        %v852 = vlaneseq
        %v853 = vshrl.u32 %v852, 7
        %v854 = vsub.s32 0, %v853
        %v855 = vrot.slane %v480, %v854
        %v856 = vlaneseq
        %v857 = vshrl.u32 %v856, 7
        %v858 = vsub.s32 0, %v857
        %v859 = vrot.slane %v504, %v858
        %v860 = vlaneseq
        %v861 = vshrl.u32 %v860, 7
        %v862 = vsub.s32 0, %v861
        %v863 = vrot.slane %v518, %v862
        %v864 = vlaneseq
        %v865 = vshrl.u32 %v864, 7
        %v866 = vsub.s32 0, %v865
        %v867 = vrot.slane %v526, %v866
        %v868 = vlaneseq
        %v869 = vshrl.u32 %v868, 7
        %v870 = vsub.s32 0, %v869
        %v871 = vrot.slane %v528, %v870
        %v872 = vlaneseq
        %v873 = vshrl.u32 %v872, 7
        %v874 = vsub.s32 0, %v873
        %v875 = vrot.slane %v511, %v874
        %v876 = vlaneseq
        %v877 = vshrl.u32 %v876, 7
        %v878 = vsub.s32 0, %v877
        %v879 = vrot.slane %v525, %v878
        %v880 = vlaneseq
        %v881 = vshrl.u32 %v880, 7
        %v882 = vsub.s32 0, %v881
        %v883 = vrot.slane %v527, %v882
        %v884 = vlaneseq
        %v885 = vshrl.u32 %v884, 7
        %v886 = vsub.s32 0, %v885
        %v887 = vrot.slane %v529, %v886
        %v888 = vlaneseq
        %v889 = vshrl.u32 %v888, 7
        %v890 = vsub.s32 0, %v889
        %v891 = vrot.slane %v553, %v890
        %v892 = vlaneseq
        %v893 = vshrl.u32 %v892, 7
        %v894 = vsub.s32 0, %v893
        %v895 = vrot.slane %v567, %v894
        %v896 = vlaneseq
        %v897 = vshrl.u32 %v896, 7
        %v898 = vsub.s32 0, %v897
        %v899 = vrot.slane %v575, %v898
        %v900 = vlaneseq
        %v901 = vshrl.u32 %v900, 7
        %v902 = vsub.s32 0, %v901
        %v903 = vrot.slane %v577, %v902
        %v904 = vlaneseq
        %v905 = vshrl.u32 %v904, 7
        %v906 = vsub.s32 0, %v905
        %v907 = vrot.slane %v560, %v906
        %v908 = vlaneseq
        %v909 = vshrl.u32 %v908, 7
        %v910 = vsub.s32 0, %v909
        %v911 = vrot.slane %v574, %v910
        %v912 = vlaneseq
        %v913 = vshrl.u32 %v912, 7
        %v914 = vsub.s32 0, %v913
        %v915 = vrot.slane %v576, %v914
        %v916 = vlaneseq
        %v917 = vshrl.u32 %v916, 7
        %v918 = vsub.s32 0, %v917
        %v919 = vrot.slane %v578, %v918
        %v920 = vlaneseq
        %v921 = vshrl.u32 %v920, 7
        %v922 = vsub.s32 0, %v921
        %v923 = vrot.slane %v602, %v922
        %v924 = vlaneseq
        %v925 = vshrl.u32 %v924, 7
        %v926 = vsub.s32 0, %v925
        %v927 = vrot.slane %v616, %v926
        %v928 = vlaneseq
        %v929 = vshrl.u32 %v928, 7
        %v930 = vsub.s32 0, %v929
        %v931 = vrot.slane %v624, %v930
        %v932 = vlaneseq
        %v933 = vshrl.u32 %v932, 7
        %v934 = vsub.s32 0, %v933
        %v935 = vrot.slane %v626, %v934
        %v936 = vlaneseq
        %v937 = vshrl.u32 %v936, 7
        %v938 = vsub.s32 0, %v937
        %v939 = vrot.slane %v609, %v938
        %v940 = vlaneseq
        %v941 = vshrl.u32 %v940, 7
        %v942 = vsub.s32 0, %v941
        %v943 = vrot.slane %v623, %v942
        %v944 = vlaneseq
        %v945 = vshrl.u32 %v944, 7
        %v946 = vsub.s32 0, %v945
        %v947 = vrot.slane %v625, %v946
        %v948 = vlaneseq
        %v949 = vshrl.u32 %v948, 7
        %v950 = vsub.s32 0, %v949
        %v951 = vrot.slane %v627, %v950
        %v952 = vlaneseq
        %v953 = vshrl.u32 %v952, 7
        %v954 = vsub.s32 0, %v953
        %v955 = vrot.slane %v651, %v954
        %v956 = vlaneseq
        %v957 = vshrl.u32 %v956, 7
        %v958 = vsub.s32 0, %v957
        %v959 = vrot.slane %v665, %v958
        %v960 = vlaneseq
        %v961 = vshrl.u32 %v960, 7
        %v962 = vsub.s32 0, %v961
        %v963 = vrot.slane %v673, %v962
        %v964 = vlaneseq
        %v965 = vshrl.u32 %v964, 7
        %v966 = vsub.s32 0, %v965
        %v967 = vrot.slane %v675, %v966
        %v968 = vlaneseq
        %v969 = vshrl.u32 %v968, 7
        %v970 = vsub.s32 0, %v969
        %v971 = vrot.slane %v658, %v970
        %v972 = vlaneseq
        %v973 = vshrl.u32 %v972, 7
        %v974 = vsub.s32 0, %v973
        %v975 = vrot.slane %v672, %v974
        %v976 = vlaneseq
        %v977 = vshrl.u32 %v976, 7
        %v978 = vsub.s32 0, %v977
        %v979 = vrot.slane %v674, %v978
        %v980 = vlaneseq
        %v981 = vshrl.u32 %v980, 7
        %v982 = vsub.s32 0, %v981
        %v983 = vrot.slane %v676, %v982
        %v984 = vlaneseq
        %v985 = vshrl.u32 %v984, 7
        %v986 = vsub.s32 0, %v985
        %v987 = vrot.slane %v700, %v986
        %v988 = vlaneseq
        %v989 = vshrl.u32 %v988, 7
        %v990 = vsub.s32 0, %v989
        %v991 = vrot.slane %v714, %v990
        %v992 = vlaneseq
        %v993 = vshrl.u32 %v992, 7
        %v994 = vsub.s32 0, %v993
        %v995 = vrot.slane %v722, %v994
        %v996 = vlaneseq
        %v997 = vshrl.u32 %v996, 7
        %v998 = vsub.s32 0, %v997
        %v999 = vrot.slane %v724, %v998
        %v1000 = vlaneseq
        %v1001 = vshrl.u32 %v1000, 7
        %v1002 = vsub.s32 0, %v1001
        %v1003 = vrot.slane %v707, %v1002
        %v1004 = vlaneseq
        %v1005 = vshrl.u32 %v1004, 7
        %v1006 = vsub.s32 0, %v1005
        %v1007 = vrot.slane %v721, %v1006
        %v1008 = vlaneseq
        %v1009 = vshrl.u32 %v1008, 7
        %v1010 = vsub.s32 0, %v1009
        %v1011 = vrot.slane %v723, %v1010
        %v1012 = vlaneseq
        %v1013 = vshrl.u32 %v1012, 7
        %v1014 = vsub.s32 0, %v1013
        %v1015 = vrot.slane %v725, %v1014
        %v1016 = vlaneseq
        %v1017 = vshrl.u32 %v1016, 7
        %v1018 = vsub.s32 0, %v1017
        %v1019 = vrot.slane %v749, %v1018
        %v1020 = vlaneseq
        %v1021 = vshrl.u32 %v1020, 7
        %v1022 = vsub.s32 0, %v1021
        %v1023 = vrot.slane %v763, %v1022
        %v1024 = vlaneseq
        %v1025 = vshrl.u32 %v1024, 7
        %v1026 = vsub.s32 0, %v1025
        %v1027 = vrot.slane %v771, %v1026
        %v1028 = vlaneseq
        %v1029 = vshrl.u32 %v1028, 7
        %v1030 = vsub.s32 0, %v1029
        %v1031 = vrot.slane %v773, %v1030
        %v1032 = vlaneseq
        %v1033 = vshrl.u32 %v1032, 7
        %v1034 = vsub.s32 0, %v1033
        %v1035 = vrot.slane %v756, %v1034
        %v1036 = vlaneseq
        %v1037 = vshrl.u32 %v1036, 7
        %v1038 = vsub.s32 0, %v1037
        %v1039 = vrot.slane %v770, %v1038
        %v1040 = vlaneseq
        %v1041 = vshrl.u32 %v1040, 7
        %v1042 = vsub.s32 0, %v1041
        %v1043 = vrot.slane %v772, %v1042
        %v1044 = vlaneseq
        %v1045 = vshrl.u32 %v1044, 7
        %v1046 = vsub.s32 0, %v1045
        %v1047 = vrot.slane %v774, %v1046
        %v1048 = vlaneseq
        %v1049 = vshrl.u32 %v1048, 7
        %v1050 = vsub.s32 0, %v1049
        %v1051 = vrot.slane %v798, %v1050
        %v1052 = vlaneseq
        %v1053 = vshrl.u32 %v1052, 7
        %v1054 = vsub.s32 0, %v1053
        %v1055 = vrot.slane %v812, %v1054
        %v1056 = vlaneseq
        %v1057 = vshrl.u32 %v1056, 7
        %v1058 = vsub.s32 0, %v1057
        %v1059 = vrot.slane %v820, %v1058
        %v1060 = vlaneseq
        %v1061 = vshrl.u32 %v1060, 7
        %v1062 = vsub.s32 0, %v1061
        %v1063 = vrot.slane %v822, %v1062
        %v1064 = vlaneseq
        %v1065 = vshrl.u32 %v1064, 7
        %v1066 = vsub.s32 0, %v1065
        %v1067 = vrot.slane %v805, %v1066
        %v1068 = vlaneseq
        %v1069 = vshrl.u32 %v1068, 7
        %v1070 = vsub.s32 0, %v1069
        %v1071 = vrot.slane %v819, %v1070
        %v1072 = vlaneseq
        %v1073 = vshrl.u32 %v1072, 7
        %v1074 = vsub.s32 0, %v1073
        %v1075 = vrot.slane %v821, %v1074
        %v1076 = vlaneseq
        %v1077 = vshrl.u32 %v1076, 7
        %v1078 = vsub.s32 0, %v1077
        %v1079 = vrot.slane %v823, %v1078
        %v1144 = vmul.f32 %v827, %v324
        %v1145 = vmul.f32 %v827, %v325
        %v1146 = vmul.f32 %v831, %v324
        %v1147 = vmul.f32 %v831, %v325
        %v1148 = vmul.f32 %v835, %v324
        %v1149 = vmul.f32 %v835, %v325
        %v1150 = vmul.f32 %v839, %v324
        %v1151 = vmul.f32 %v839, %v325
        %v1152 = vmul.f32 %v843, %v324
        %v1153 = vmul.f32 %v843, %v325
        %v1154 = vmul.f32 %v847, %v324
        %v1155 = vmul.f32 %v847, %v325
        %v1156 = vmul.f32 %v851, %v324
        %v1157 = vmul.f32 %v851, %v325
        %v1158 = vmul.f32 %v855, %v324
        %v1159 = vmul.f32 %v855, %v325
        %v1160 = vmul.f32 %v859, %v324
        %v1161 = vmul.f32 %v859, %v325
        %v1162 = vmul.f32 %v863, %v324
        %v1163 = vmul.f32 %v863, %v325
        %v1164 = vmul.f32 %v867, %v324
        %v1165 = vmul.f32 %v867, %v325
        %v1166 = vmul.f32 %v871, %v324
        %v1167 = vmul.f32 %v871, %v325
        %v1168 = vmul.f32 %v875, %v324
        %v1169 = vmul.f32 %v875, %v325
        %v1170 = vmul.f32 %v879, %v324
        %v1171 = vmul.f32 %v879, %v325
        %v1172 = vmul.f32 %v883, %v324
        %v1173 = vmul.f32 %v883, %v325
        %v1174 = vmul.f32 %v887, %v324
        %v1175 = vmul.f32 %v887, %v325
        %v1176 = vmul.f32 %v891, %v324
        %v1177 = vmul.f32 %v891, %v325
        %v1178 = vmul.f32 %v895, %v324
        %v1179 = vmul.f32 %v895, %v325
        %v1180 = vmul.f32 %v899, %v324
        %v1181 = vmul.f32 %v899, %v325
        %v1182 = vmul.f32 %v903, %v324
        %v1183 = vmul.f32 %v903, %v325
        %v1184 = vmul.f32 %v907, %v324
        %v1185 = vmul.f32 %v907, %v325
        %v1186 = vmul.f32 %v911, %v324
        %v1187 = vmul.f32 %v911, %v325
        %v1188 = vmul.f32 %v915, %v324
        %v1189 = vmul.f32 %v915, %v325
        %v1190 = vmul.f32 %v919, %v324
        %v1191 = vmul.f32 %v919, %v325
        %v1192 = vmul.f32 %v923, %v324
        %v1193 = vmul.f32 %v923, %v325
        %v1194 = vmul.f32 %v927, %v324
        %v1195 = vmul.f32 %v927, %v325
        %v1196 = vmul.f32 %v931, %v324
        %v1197 = vmul.f32 %v931, %v325
        %v1198 = vmul.f32 %v935, %v324
        %v1199 = vmul.f32 %v935, %v325
        %v1200 = vmul.f32 %v939, %v324
        %v1201 = vmul.f32 %v939, %v325
        %v1202 = vmul.f32 %v943, %v324
        %v1203 = vmul.f32 %v943, %v325
        %v1204 = vmul.f32 %v947, %v324
        %v1205 = vmul.f32 %v947, %v325
        %v1206 = vmul.f32 %v951, %v324
        %v1207 = vmul.f32 %v951, %v325
        %v1208 = vmul.f32 %v955, %v324
        %v1209 = vmul.f32 %v955, %v325
        %v1210 = vmul.f32 %v959, %v324
        %v1211 = vmul.f32 %v959, %v325
        %v1212 = vmul.f32 %v963, %v324
        %v1213 = vmul.f32 %v963, %v325
        %v1214 = vmul.f32 %v967, %v324
        %v1215 = vmul.f32 %v967, %v325
        %v1216 = vmul.f32 %v971, %v324
        %v1217 = vmul.f32 %v971, %v325
        %v1218 = vmul.f32 %v975, %v324
        %v1219 = vmul.f32 %v975, %v325
        %v1220 = vmul.f32 %v979, %v324
        %v1221 = vmul.f32 %v979, %v325
        %v1222 = vmul.f32 %v983, %v324
        %v1223 = vmul.f32 %v983, %v325
        %v1224 = vmul.f32 %v987, %v324
        %v1225 = vmul.f32 %v987, %v325
        %v1226 = vmul.f32 %v991, %v324
        %v1227 = vmul.f32 %v991, %v325
        %v1228 = vmul.f32 %v995, %v324
        %v1229 = vmul.f32 %v995, %v325
        %v1230 = vmul.f32 %v999, %v324
        %v1231 = vmul.f32 %v999, %v325
        %v1232 = vmul.f32 %v1003, %v324
        %v1233 = vmul.f32 %v1003, %v325
        %v1234 = vmul.f32 %v1007, %v324
        %v1235 = vmul.f32 %v1007, %v325
        %v1236 = vmul.f32 %v1011, %v324
        %v1237 = vmul.f32 %v1011, %v325
        %v1238 = vmul.f32 %v1015, %v324
        %v1239 = vmul.f32 %v1015, %v325
        %v1240 = vmul.f32 %v1019, %v324
        %v1241 = vmul.f32 %v1019, %v325
        %v1242 = vmul.f32 %v1023, %v324
        %v1243 = vmul.f32 %v1023, %v325
        %v1244 = vmul.f32 %v1027, %v324
        %v1245 = vmul.f32 %v1027, %v325
        %v1246 = vmul.f32 %v1031, %v324
        %v1247 = vmul.f32 %v1031, %v325
        %v1248 = vmul.f32 %v1035, %v324
        %v1249 = vmul.f32 %v1035, %v325
        %v1250 = vmul.f32 %v1039, %v324
        %v1251 = vmul.f32 %v1039, %v325
        %v1252 = vmul.f32 %v1043, %v324
        %v1253 = vmul.f32 %v1043, %v325
        %v1254 = vmul.f32 %v1047, %v324
        %v1255 = vmul.f32 %v1047, %v325
        %v1256 = vmul.f32 %v1051, %v324
        %v1257 = vmul.f32 %v1051, %v325
        %v1258 = vmul.f32 %v1055, %v324
        %v1259 = vmul.f32 %v1055, %v325
        %v1260 = vmul.f32 %v1059, %v324
        %v1261 = vmul.f32 %v1059, %v325
        %v1262 = vmul.f32 %v1063, %v324
        %v1263 = vmul.f32 %v1063, %v325
        %v1264 = vmul.f32 %v1067, %v324
        %v1265 = vmul.f32 %v1067, %v325
        %v1266 = vmul.f32 %v1071, %v324
        %v1267 = vmul.f32 %v1071, %v325
        %v1268 = vmul.f32 %v1075, %v324
        %v1269 = vmul.f32 %v1075, %v325
        %v1270 = vmul.f32 %v1079, %v324
        %v1271 = vmul.f32 %v1079, %v325
        %v1272 = vld [vmem:[%s179] sm:$0xff]
        %v1273 = vld [vmem:[%s179 + $0x8] sm:$0xff]
        %v1274 = vld [vmem:[%s179 + $0x10] sm:$0xff]
        %v1275 = vld [vmem:[%s179 + $0x18] sm:$0xff]
        %v1276 = vld [vmem:[#allocation2] sm:$0xf]
        %v1281 = vcombine.high %v1272, %v1272
        %v1282 = vcombine.high %v1273, %v1273
        %v1283 = vcombine.high %v1274, %v1274
        %v1284 = vcombine.high %v1275, %v1275
        %1289 = vmatprep.subr.mxu0 0.0
        %1290 = vmatpush1.msra.mxu0 %v1159
        %1291 = vmatprep.subr.mxu0 0.0
        %1292 = vmatpush1.msra.mxu0 %v1158
        %1293 = vmatprep.subr.mxu0 0.0
        %1294 = vmatpush1.msra.mxu0 %v1157
        %1295 = vmatprep.subr.mxu0 0.0
        %1296 = vmatpush1.msra.mxu0 %v1156
        %1297 = vmatprep.subr.mxu0 0.0
        %1298 = vmatpush1.msra.mxu0 %v1155
        %1299 = vmatprep.subr.mxu0 0.0
        %1300 = vmatpush1.msra.mxu0 %v1154
        %1301 = vmatprep.subr.mxu0 0.0
        %1302 = vmatpush1.msra.mxu0 %v1153
        %1303 = vmatprep.subr.mxu0 0.0
        %1304 = vmatpush1.msra.mxu0 %v1152
        %1305 = vmatprep.subr.mxu0 0.0
        %1306 = vmatpush1.msra.mxu0 %v1151
        %1307 = vmatprep.subr.mxu0 0.0
        %1308 = vmatpush1.msra.mxu0 %v1150
        %1309 = vmatprep.subr.mxu0 0.0
        %1310 = vmatpush1.msra.mxu0 %v1149
        %1311 = vmatprep.subr.mxu0 0.0
        %1312 = vmatpush1.msra.mxu0 %v1148
        %1313 = vmatprep.subr.mxu0 0.0
        %1314 = vmatpush1.msra.mxu0 %v1147
        %1315 = vmatprep.subr.mxu0 0.0
        %1316 = vmatpush1.msra.mxu0 %v1146
        %1317 = vmatprep.subr.mxu0 0.0
        %1318 = vmatpush1.msra.mxu0 %v1145
        %1319 = vmatprep.subr.mxu0 0.0
        %1320 = vmatpush1.msra.mxu0 %v1144
        %1321 = vmatprep.subr.mxu0 0.0
        %1322 = vmatpush2.msra.mxu0 %v1175
        %1323 = vmatprep.subr.mxu0 0.0
        %1324 = vmatpush2.msra.mxu0 %v1174
        %1325 = vmatprep.subr.mxu0 0.0
        %1326 = vmatpush2.msra.mxu0 %v1173
        %1327 = vmatprep.subr.mxu0 0.0
        %1328 = vmatpush2.msra.mxu0 %v1172
        %1329 = vmatprep.subr.mxu0 0.0
        %1330 = vmatpush2.msra.mxu0 %v1171
        %1331 = vmatprep.subr.mxu0 0.0
        %1332 = vmatpush2.msra.mxu0 %v1170
        %1333 = vmatprep.subr.mxu0 0.0
        %1334 = vmatpush2.msra.mxu0 %v1169
        %1335 = vmatprep.subr.mxu0 0.0
        %1336 = vmatpush2.msra.mxu0 %v1168
        %1337 = vmatprep.subr.mxu0 0.0
        %1338 = vmatpush2.msra.mxu0 %v1167
        %1339 = vmatprep.subr.mxu0 0.0
        %1340 = vmatpush2.msra.mxu0 %v1166
        %1341 = vmatprep.subr.mxu0 0.0
        %1342 = vmatpush2.msra.mxu0 %v1165
        %1343 = vmatprep.subr.mxu0 0.0
        %1344 = vmatpush2.msra.mxu0 %v1164
        %1345 = vmatprep.subr.mxu0 0.0
        %1346 = vmatpush2.msra.mxu0 %v1163
        %1347 = vmatprep.subr.mxu0 0.0
        %1348 = vmatpush2.msra.mxu0 %v1162
        %1349 = vmatprep.subr.mxu0 0.0
        %1350 = vmatpush2.msra.mxu0 %v1161
        %1351 = vmatprep.subr.mxu0 0.0
        %1352 = vmatpush2.msra.mxu0 %v1160
        %1353 = vmatprep.mubr.f32.mxu0 %v1281
        %1354 = vmatmul.mubr.f32.gmra.mxu0 %v1272
        %v1355 = vpop.f32.mrf.mxu0
        %v1356 = vadd.f32 0.0, %v1355
        %v1357 = vpop.f32.mrf.mxu0
        %1358 = vdwg.mxu0
        %1359 = vmatprep.subr.mxu0 0.0
        %1360 = vmatpush1.msra.mxu0 %v1191
        %1361 = vmatprep.subr.mxu0 0.0
        %1362 = vmatpush1.msra.mxu0 %v1190
        %1363 = vmatprep.subr.mxu0 0.0
        %1364 = vmatpush1.msra.mxu0 %v1189
        %1365 = vmatprep.subr.mxu0 0.0
        %1366 = vmatpush1.msra.mxu0 %v1188
        %1367 = vmatprep.subr.mxu0 0.0
        %1368 = vmatpush1.msra.mxu0 %v1187
        %1369 = vmatprep.subr.mxu0 0.0
        %1370 = vmatpush1.msra.mxu0 %v1186
        %1371 = vmatprep.subr.mxu0 0.0
        %1372 = vmatpush1.msra.mxu0 %v1185
        %1373 = vmatprep.subr.mxu0 0.0
        %1374 = vmatpush1.msra.mxu0 %v1184
        %1375 = vmatprep.subr.mxu0 0.0
        %1376 = vmatpush1.msra.mxu0 %v1183
        %1377 = vmatprep.subr.mxu0 0.0
        %1378 = vmatpush1.msra.mxu0 %v1182
        %1379 = vmatprep.subr.mxu0 0.0
        %1380 = vmatpush1.msra.mxu0 %v1181
        %1381 = vmatprep.subr.mxu0 0.0
        %1382 = vmatpush1.msra.mxu0 %v1180
        %1383 = vmatprep.subr.mxu0 0.0
        %1384 = vmatpush1.msra.mxu0 %v1179
        %1385 = vmatprep.subr.mxu0 0.0
        %1386 = vmatpush1.msra.mxu0 %v1178
        %1387 = vmatprep.subr.mxu0 0.0
        %1388 = vmatpush1.msra.mxu0 %v1177
        %1389 = vmatprep.subr.mxu0 0.0
        %1390 = vmatpush1.msra.mxu0 %v1176
        %1391 = vmatprep.subr.mxu0 0.0
        %1392 = vmatpush2.msra.mxu0 %v1207
        %1393 = vmatprep.subr.mxu0 0.0
        %1394 = vmatpush2.msra.mxu0 %v1206
        %1395 = vmatprep.subr.mxu0 0.0
        %1396 = vmatpush2.msra.mxu0 %v1205
        %1397 = vmatprep.subr.mxu0 0.0
        %1398 = vmatpush2.msra.mxu0 %v1204
        %1399 = vmatprep.subr.mxu0 0.0
        %1400 = vmatpush2.msra.mxu0 %v1203
        %1401 = vmatprep.subr.mxu0 0.0
        %1402 = vmatpush2.msra.mxu0 %v1202
        %1403 = vmatprep.subr.mxu0 0.0
        %1404 = vmatpush2.msra.mxu0 %v1201
        %1405 = vmatprep.subr.mxu0 0.0
        %1406 = vmatpush2.msra.mxu0 %v1200
        %1407 = vmatprep.subr.mxu0 0.0
        %1408 = vmatpush2.msra.mxu0 %v1199
        %1409 = vmatprep.subr.mxu0 0.0
        %1410 = vmatpush2.msra.mxu0 %v1198
        %1411 = vmatprep.subr.mxu0 0.0
        %1412 = vmatpush2.msra.mxu0 %v1197
        %1413 = vmatprep.subr.mxu0 0.0
        %1414 = vmatpush2.msra.mxu0 %v1196
        %1415 = vmatprep.subr.mxu0 0.0
        %1416 = vmatpush2.msra.mxu0 %v1195
        %1417 = vmatprep.subr.mxu0 0.0
        %1418 = vmatpush2.msra.mxu0 %v1194
        %1419 = vmatprep.subr.mxu0 0.0
        %1420 = vmatpush2.msra.mxu0 %v1193
        %1421 = vmatprep.subr.mxu0 0.0
        %1422 = vmatpush2.msra.mxu0 %v1192
        %1423 = vmatprep.mubr.f32.mxu0 %v1282
        %1424 = vmatmul.mubr.f32.gmra.mxu0 %v1273
        %v1425 = vpop.f32.mrf.mxu0
        %v1426 = vadd.f32 %v1356, %v1425
        %v1427 = vpop.f32.mrf.mxu0
        %1428 = vdwg.mxu0
        %1429 = vmatprep.subr.mxu0 0.0
        %1430 = vmatpush1.msra.mxu0 %v1223
        %1431 = vmatprep.subr.mxu0 0.0
        %1432 = vmatpush1.msra.mxu0 %v1222
        %1433 = vmatprep.subr.mxu0 0.0
        %1434 = vmatpush1.msra.mxu0 %v1221
        %1435 = vmatprep.subr.mxu0 0.0
        %1436 = vmatpush1.msra.mxu0 %v1220
        %1437 = vmatprep.subr.mxu0 0.0
        %1438 = vmatpush1.msra.mxu0 %v1219
        %1439 = vmatprep.subr.mxu0 0.0
        %1440 = vmatpush1.msra.mxu0 %v1218
        %1441 = vmatprep.subr.mxu0 0.0
        %1442 = vmatpush1.msra.mxu0 %v1217
        %1443 = vmatprep.subr.mxu0 0.0
        %1444 = vmatpush1.msra.mxu0 %v1216
        %1445 = vmatprep.subr.mxu0 0.0
        %1446 = vmatpush1.msra.mxu0 %v1215
        %1447 = vmatprep.subr.mxu0 0.0
        %1448 = vmatpush1.msra.mxu0 %v1214
        %1449 = vmatprep.subr.mxu0 0.0
        %1450 = vmatpush1.msra.mxu0 %v1213
        %1451 = vmatprep.subr.mxu0 0.0
        %1452 = vmatpush1.msra.mxu0 %v1212
        %1453 = vmatprep.subr.mxu0 0.0
        %1454 = vmatpush1.msra.mxu0 %v1211
        %1455 = vmatprep.subr.mxu0 0.0
        %1456 = vmatpush1.msra.mxu0 %v1210
        %1457 = vmatprep.subr.mxu0 0.0
        %1458 = vmatpush1.msra.mxu0 %v1209
        %1459 = vmatprep.subr.mxu0 0.0
        %1460 = vmatpush1.msra.mxu0 %v1208
        %1461 = vmatprep.subr.mxu0 0.0
        %1462 = vmatpush2.msra.mxu0 %v1239
        %1463 = vmatprep.subr.mxu0 0.0
        %1464 = vmatpush2.msra.mxu0 %v1238
        %1465 = vmatprep.subr.mxu0 0.0
        %1466 = vmatpush2.msra.mxu0 %v1237
        %1467 = vmatprep.subr.mxu0 0.0
        %1468 = vmatpush2.msra.mxu0 %v1236
        %1469 = vmatprep.subr.mxu0 0.0
        %1470 = vmatpush2.msra.mxu0 %v1235
        %1471 = vmatprep.subr.mxu0 0.0
        %1472 = vmatpush2.msra.mxu0 %v1234
        %1473 = vmatprep.subr.mxu0 0.0
        %1474 = vmatpush2.msra.mxu0 %v1233
        %1475 = vmatprep.subr.mxu0 0.0
        %1476 = vmatpush2.msra.mxu0 %v1232
        %1477 = vmatprep.subr.mxu0 0.0
        %1478 = vmatpush2.msra.mxu0 %v1231
        %1479 = vmatprep.subr.mxu0 0.0
        %1480 = vmatpush2.msra.mxu0 %v1230
        %1481 = vmatprep.subr.mxu0 0.0
        %1482 = vmatpush2.msra.mxu0 %v1229
        %1483 = vmatprep.subr.mxu0 0.0
        %1484 = vmatpush2.msra.mxu0 %v1228
        %1485 = vmatprep.subr.mxu0 0.0
        %1486 = vmatpush2.msra.mxu0 %v1227
        %1487 = vmatprep.subr.mxu0 0.0
        %1488 = vmatpush2.msra.mxu0 %v1226
        %1489 = vmatprep.subr.mxu0 0.0
        %1490 = vmatpush2.msra.mxu0 %v1225
        %1491 = vmatprep.subr.mxu0 0.0
        %1492 = vmatpush2.msra.mxu0 %v1224
        %1493 = vmatprep.mubr.f32.mxu0 %v1283
        %1494 = vmatmul.mubr.f32.gmra.mxu0 %v1274
        %v1495 = vpop.f32.mrf.mxu0
        %v1496 = vadd.f32 %v1426, %v1495
        %v1497 = vpop.f32.mrf.mxu0
        %1498 = vdwg.mxu0
        %1499 = vmatprep.subr.mxu0 0.0
        %1500 = vmatpush1.msra.mxu0 %v1255
        %1501 = vmatprep.subr.mxu0 0.0
        %1502 = vmatpush1.msra.mxu0 %v1254
        %1503 = vmatprep.subr.mxu0 0.0
        %1504 = vmatpush1.msra.mxu0 %v1253
        %1505 = vmatprep.subr.mxu0 0.0
        %1506 = vmatpush1.msra.mxu0 %v1252
        %1507 = vmatprep.subr.mxu0 0.0
        %1508 = vmatpush1.msra.mxu0 %v1251
        %1509 = vmatprep.subr.mxu0 0.0
        %1510 = vmatpush1.msra.mxu0 %v1250
        %1511 = vmatprep.subr.mxu0 0.0
        %1512 = vmatpush1.msra.mxu0 %v1249
        %1513 = vmatprep.subr.mxu0 0.0
        %1514 = vmatpush1.msra.mxu0 %v1248
        %1515 = vmatprep.subr.mxu0 0.0
        %1516 = vmatpush1.msra.mxu0 %v1247
        %1517 = vmatprep.subr.mxu0 0.0
        %1518 = vmatpush1.msra.mxu0 %v1246
        %1519 = vmatprep.subr.mxu0 0.0
        %1520 = vmatpush1.msra.mxu0 %v1245
        %1521 = vmatprep.subr.mxu0 0.0
        %1522 = vmatpush1.msra.mxu0 %v1244
        %1523 = vmatprep.subr.mxu0 0.0
        %1524 = vmatpush1.msra.mxu0 %v1243
        %1525 = vmatprep.subr.mxu0 0.0
        %1526 = vmatpush1.msra.mxu0 %v1242
        %1527 = vmatprep.subr.mxu0 0.0
        %1528 = vmatpush1.msra.mxu0 %v1241
        %1529 = vmatprep.subr.mxu0 0.0
        %1530 = vmatpush1.msra.mxu0 %v1240
        %1531 = vmatprep.subr.mxu0 0.0
        %1532 = vmatpush2.msra.mxu0 %v1271
        %1533 = vmatprep.subr.mxu0 0.0
        %1534 = vmatpush2.msra.mxu0 %v1270
        %1535 = vmatprep.subr.mxu0 0.0
        %1536 = vmatpush2.msra.mxu0 %v1269
        %1537 = vmatprep.subr.mxu0 0.0
        %1538 = vmatpush2.msra.mxu0 %v1268
        %1539 = vmatprep.subr.mxu0 0.0
        %1540 = vmatpush2.msra.mxu0 %v1267
        %1541 = vmatprep.subr.mxu0 0.0
        %1542 = vmatpush2.msra.mxu0 %v1266
        %1543 = vmatprep.subr.mxu0 0.0
        %1544 = vmatpush2.msra.mxu0 %v1265
        %1545 = vmatprep.subr.mxu0 0.0
        %1546 = vmatpush2.msra.mxu0 %v1264
        %1547 = vmatprep.subr.mxu0 0.0
        %1548 = vmatpush2.msra.mxu0 %v1263
        %1549 = vmatprep.subr.mxu0 0.0
        %1550 = vmatpush2.msra.mxu0 %v1262
        %1551 = vmatprep.subr.mxu0 0.0
        %1552 = vmatpush2.msra.mxu0 %v1261
        %1553 = vmatprep.subr.mxu0 0.0
        %1554 = vmatpush2.msra.mxu0 %v1260
        %1555 = vmatprep.subr.mxu0 0.0
        %1556 = vmatpush2.msra.mxu0 %v1259
        %1557 = vmatprep.subr.mxu0 0.0
        %1558 = vmatpush2.msra.mxu0 %v1258
        %1559 = vmatprep.subr.mxu0 0.0
        %1560 = vmatpush2.msra.mxu0 %v1257
        %1561 = vmatprep.subr.mxu0 0.0
        %1562 = vmatpush2.msra.mxu0 %v1256
        %1563 = vmatprep.mubr.f32.mxu0 %v1284
        %1564 = vmatmul.mubr.f32.gmra.mxu0 %v1275
        %v1565 = vpop.f32.mrf.mxu0
        %v1566 = vadd.f32 %v1496, %v1565
        %v1567 = vpop.f32.mrf.mxu0
        %1568 = vdwg.mxu0
        %v1569 = vadd.f32 %v1276, %v1566
        %1570 = vst [vmem:[#allocation2] sm:$0xf] %v1569
        %p1571 = scmp.eq.s32.totalorder %s26, 1
        // Predicated region
        $region37: #{tpu_custom_call.1} parent=27 // pred_check
          %p1572 = pneg %p1571
        $region38: #{tpu_custom_call.1} parent=27 // pred_check_branch
          %1574 = sbr.rel (%p1572) target = $region40
        $region39: #{tpu_custom_call.1} parent=27 // pred_region
          %v1575 = vld [vmem:[#allocation2] sm:$0xf]
          %1576 = vst [vmem:[%s207] sm:$0xf] %v1575
        $region40: #{tpu_custom_call.1} parent=27 // pred_fallthru
          _
        %s1577 = sand.u32 %s104, 1
        %s1578 = scalar_lea.sflag [#allocation5], %s1577
        %s1579 = sand.u32 %s104, 1
        %s1580 = smul.addr %s1579, 4
        %s1581 = scalar_lea.vmem [#allocation6], %s1580
        // Predicated region
        $region41: #{tpu_custom_call.1} parent=27 // pred_check
          %p1582 = pneg %p114
        $region42: #{tpu_custom_call.1} parent=27 // pred_check_branch
          %1584 = sbr.rel (%p1582) target = $region44
        $region43: #{tpu_custom_call.1} parent=27 // pred_region
          %s1586 = ssub.s32 64, 64
          %1587 = vsyncadd %s1578, %s1586
          %s1588 = smul.addr %s24, 2
          %s1589 = sadd.s32 %s25, %s1588
          %s1590 = smul.addr %s1589, 64
          %s1591 = scalar_lea.hbm %s2, %s1590
          %s1593 = sshll.u32 %s1581, 4
          %s1594 = int_to_ptr.vmem [resolvable:$true] %s1593
          %1596 = dma.vmem_to_hbm [thread:$0]  %s1594, 64, %s1591, %s1578
        $region44: #{tpu_custom_call.1} parent=27 // pred_fallthru
          _
      $region28: #{tpu_custom_call.1} parent=5 // pred_fallthru
        _
      %p1597 = scmp.le.s32.totalorder 2, %s14
      // Predicated region
      $region45: #{tpu_custom_call.1} parent=5 // pred_check
        %p1598 = pneg %p1597
      $region46: #{tpu_custom_call.1} parent=5 // pred_check_branch
        %1600 = sbr.rel (%p1598) target = $region48
      $region47: #{tpu_custom_call.1} parent=5 // pred_region
        %s1601 = ssub.s32 %s14, 2
        // Predicated region
        $region49: #{tpu_custom_call.1} parent=47 // pred_check
          %p1602 = pneg %p120
        $region50: #{tpu_custom_call.1} parent=47 // pred_check_branch
          %1604 = sbr.rel (%p1602) target = $region52
        $region51: #{tpu_custom_call.1} parent=47 // pred_region
          %s1605 = sand.u32 %s105, 1
          %s1606 = scalar_lea.sflag [#allocation5], %s1605
          %s1607 = sand.u32 %s105, 1
          %s1608 = smul.addr %s1607, 4
          %s1609 = scalar_lea.vmem [#allocation6], %s1608
          %1610 = dma.done %s1606, 64
        $region52: #{tpu_custom_call.1} parent=47 // pred_fallthru
          _
      $region48: #{tpu_custom_call.1} parent=5 // pred_fallthru
        _
    $region6: #{tpu_custom_call.1} parent=1 // loop_footer
      %s18 = sadd.s32 1, %s14
    $region7: #{tpu_custom_call.1} parent=1 // loop_footer_branch
      %13 = sbr.rel target = $region3
    $region8: #{tpu_custom_call.1} parent=1 // loop_exit
      _
    %1611 = vsyncpa [#allocation4], 1
    %s1612 = scalar_lea.sflag [#allocation4], 1
    %1613 = vsyncpa %s1612, 1
    %1614 = vsyncpa [#allocation5], 1
    %s1615 = scalar_lea.sflag [#allocation5], 1
    %1616 = vsyncpa %s1615, 1

</llo_original>
